<compile_context>
chip_gen: v7x
topology: tpu7x:2x2x1
jax: 0.10.0
libtpu: 0.0.40
codegen_flags: <defaults>
</compile_context>

<pallas_src>
import numpy as np
import jax
import jax.numpy as jnp
from jax import lax
from jax.experimental import pallas as pl
from jax.experimental.pallas import tpu as pltpu

# ----------------------------- model config -------------------------------
B = 2                         # batch
CIN, C1, C2 = 3, 8, 16        # input / conv1 / conv2 channels
K = 3                         # conv kernel size (= pooled output side)
H = W = 18                    # input spatial size -> flatten == C2*K*K
H1, H2, NC = 32, 16, 10       # fc hidden sizes / n_classes
ACTIVATION = "relu"           # 'relu' or 'sigmoid'

HO1, WO1 = H - K + 1, W - K + 1          # 16, 16   conv1 output
HP1, WP1 = HO1 // 2, WO1 // 2            # 8, 8     pool1 output
HO2, WO2 = HP1 - K + 1, WP1 - K + 1      # 6, 6     conv2 output
HP2, WP2 = HO2 // 2, WO2 // 2            # 3, 3     pool2 output

LANES = 128
KBLK = 64                     # per-tap lane block of the conv1 im2col (>= W*CIN)
X1K = K * KBLK                # 192  conv1 contraction width
A1_COLS = 2 * LANES           # 256  conv1 output lanes (even/odd column split)
A2_COLS = 2 * LANES           # 256  conv2 output lanes
A2ROWS = (B - 1) * HP1 + HO2  # 14   valid conv2 rows (batch folded)
A2PAD = 16                    # conv2 scratch rows (tail zeroed)

# static checks tying all hand-derived packing constants to the model dims
assert 2 * HP1 == HO1 and 2 * WP1 == WO1
assert HO2 == HP1 - K + 1 and WO2 == WP1 - K + 1
assert 2 * HP2 == HO2 and 2 * WP2 == WO2
assert HP2 * WP2 == K * K                      # pooled map matches fc1 in_features
assert W * CIN <= KBLK
assert (WO1 // 2 + 1) * C1 <= LANES            # conv1 even/odd column packing fits
assert (WO2 // 2 + 1) * C2 <= LANES            # conv2 even/odd column packing fits
assert WP1 * C1 <= LANES and WP2 * C2 <= LANES
assert (K - 1) + A2ROWS <= B * HP1             # conv2 row windows stay inside p1
assert A2ROWS <= A2PAD and HP2 * B <= 8


def _act(v):
    if ACTIVATION == "sigmoid":
        return jax.nn.sigmoid(v)
    return jnp.maximum(v, 0.0)


# ------------------------------ Pallas kernel ------------------------------
def _cnn_kernel(x1_ref, s1a_ref, s1b_ref, s2a_ref, s2b_ref,
                w1_ref, b1_ref, w2_ref, b2_ref,
                wf1_ref, bf1_ref, wf2_ref, bf2_ref, wo_ref, bo_ref,
                out_ref,
                p1_ref, a2_ref, fcp_ref):
    f32 = jnp.float32

    # ---- conv1 (+bias, act): one matmul, batch folded into M --------------
    a1 = _act(jnp.dot(x1_ref[...], w1_ref[...], preferred_element_type=f32)
              + b1_ref[...])                                    # (32, 256)

    # ---- maxpool 2x2 #1: even/odd output columns are 128 lanes apart ------
    m1 = jnp.maximum(a1[:, :LANES], a1[:, LANES:])              # (32, 128)
    p1_ref[...] = jnp.maximum(
        jnp.dot(s1a_ref[...], m1, preferred_element_type=f32),  # rows 2*hp
        jnp.dot(s1b_ref[...], m1, preferred_element_type=f32))  # rows 2*hp+1

    # ---- conv2 (+bias, act): 3 banded matmuls (one per kernel row) --------
    acc = jnp.dot(p1_ref[pl.ds(0, A2ROWS), :], w2_ref[0], preferred_element_type=f32)
    acc += jnp.dot(p1_ref[pl.ds(1, A2ROWS), :], w2_ref[1], preferred_element_type=f32)
    acc += jnp.dot(p1_ref[pl.ds(2, A2ROWS), :], w2_ref[2], preferred_element_type=f32)
    a2_ref[pl.ds(0, A2ROWS), :] = _act(acc + b2_ref[...])
    a2_ref[pl.ds(A2ROWS, A2PAD - A2ROWS), :] = jnp.zeros(
        (A2PAD - A2ROWS, A2_COLS), f32)                         # pad rows only

    # ---- maxpool 2x2 #2 (rows re-ordered to h*B + b for the fc head) ------
    a2 = a2_ref[...]
    m2 = jnp.maximum(a2[:, :LANES], a2[:, LANES:])              # (16, 128)
    fcp_ref[...] = jnp.maximum(
        jnp.dot(s2a_ref[...], m2, preferred_element_type=f32),
        jnp.dot(s2b_ref[...], m2, preferred_element_type=f32))  # (8, 128)

    # ---- fc1 (+act): one matmul per pooled row, both batch rows as M ------
    f = jnp.dot(fcp_ref[pl.ds(0, B), :], wf1_ref[0], preferred_element_type=f32)
    f += jnp.dot(fcp_ref[pl.ds(B, B), :], wf1_ref[1], preferred_element_type=f32)
    f += jnp.dot(fcp_ref[pl.ds(2 * B, B), :], wf1_ref[2], preferred_element_type=f32)
    h1 = _act(f + bf1_ref[...])                                 # (B, 32)

    # ---- fc2 (+act) and output layer ---------------------------------------
    h2 = _act(jnp.dot(h1, wf2_ref[...], preferred_element_type=f32)
              + bf2_ref[...])                                   # (B, 16)
    out_ref[...] = (jnp.dot(h2, wo_ref[...], preferred_element_type=f32)
                    + bo_ref[...])                              # (B, 128)


# ---------------------------- wrapper / prep -------------------------------
def _fullblock(shape):
    return pl.BlockSpec(shape, lambda i, _n=len(shape): (0,) * _n)


def prepare_params(p):
    """One-time: repack weights into banded, lane-dense GEMM-ready layouts."""
    w1 = np.asarray(p["w1"], np.float32)       # (C1, CIN, K, K)
    b1 = np.asarray(p["b1"], np.float32)
    w2 = np.asarray(p["w2"], np.float32)       # (C2, C1, K, K)
    b2 = np.asarray(p["b2"], np.float32)
    f1w = np.asarray(p["fc1_w"], np.float32)   # (H1, C2*K*K)
    f1b = np.asarray(p["fc1_b"], np.float32)
    f2w = np.asarray(p["fc2_w"], np.float32)   # (H2, H1)
    f2b = np.asarray(p["fc2_b"], np.float32)
    ow = np.asarray(p["out_w"], np.float32)    # (NC, H2)
    ob = np.asarray(p["out_b"], np.float32)

    col1 = lambda wo, co: (wo % 2) * LANES + (wo // 2) * C1 + co
    col2 = lambda wo, co: (wo % 2) * LANES + (wo // 2) * C2 + co

    # conv1 banded weight: rows = ki*KBLK + w_in*CIN + ci, cols = col1(wo, co)
    w1b = np.zeros((X1K, A1_COLS), np.float32)
    b1r = np.zeros((1, A1_COLS), np.float32)
    for wo in range(WO1):
        for co in range(C1):
            b1r[0, col1(wo, co)] = b1[co]
            for ki in range(K):
                for kj in range(K):
                    for ci in range(CIN):
                        w1b[ki * KBLK + (wo + kj) * CIN + ci, col1(wo, co)] = \
                            w1[co, ci, ki, kj]

    # conv2 banded weights (per kernel row ki): rows = w_in*C1 + ci (p1 lanes)
    w2b = np.zeros((K, LANES, A2_COLS), np.float32)
    b2r = np.zeros((1, A2_COLS), np.float32)
    for wo in range(WO2):
        for co in range(C2):
            b2r[0, col2(wo, co)] = b2[co]
            for ki in range(K):
                for kj in range(K):
                    for ci in range(C1):
                        w2b[ki, (wo + kj) * C1 + ci, col2(wo, co)] = \
                            w2[co, ci, ki, kj]

    # pool1 row-select matrices (rows b*HP1+hp pick conv1 rows 2hp / 2hp+1)
    s1a = np.zeros((B * HP1, B * HO1), np.float32)
    s1b = np.zeros((B * HP1, B * HO1), np.float32)
    for b in range(B):
        for hp in range(HP1):
            s1a[b * HP1 + hp, b * HO1 + 2 * hp] = 1.0
            s1b[b * HP1 + hp, b * HO1 + 2 * hp + 1] = 1.0

    # pool2 row-select matrices, output rows ordered h*B + b for the fc head
    s2a = np.zeros((8, A2PAD), np.float32)
    s2b = np.zeros((8, A2PAD), np.float32)
    for hcol in range(HP2):
        for b in range(B):
            s2a[hcol * B + b, b * HP1 + 2 * hcol] = 1.0
            s2b[hcol * B + b, b * HP1 + 2 * hcol + 1] = 1.0

    # fc1 weights per pooled row h: rows = pw*C2 + co (pool2 lanes)
    wf1 = np.zeros((HP2, LANES, H1), np.float32)
    for hcol in range(HP2):
        for pw in range(WP2):
            for co in range(C2):
                wf1[hcol, pw * C2 + co, :] = \
                    f1w[:, co * (HP2 * WP2) + hcol * WP2 + pw]

    wo_p = np.zeros((H2, LANES), np.float32)
    wo_p[:, :NC] = ow.T
    bo_p = np.zeros((1, LANES), np.float32)
    bo_p[0, :NC] = ob

    to = jnp.asarray
    return {
        "s1a": to(s1a), "s1b": to(s1b), "s2a": to(s2a), "s2b": to(s2b),
        "w1": to(w1b), "b1": to(b1r),
        "w2": to(w2b), "b2": to(b2r),
        "wf1": to(wf1), "bf1": to(f1b.reshape(1, H1)),
        "wf2": to(f2w.T.copy()), "bf2": to(f2b.reshape(1, H2)),
        "wo": to(wo_p), "bo": to(bo_p),
    }


@jax.jit
def cnn_forward(x, wp):
    # im2col-lite for conv1: rows = b*HO1 + ho, lanes = ki*KBLK + w*CIN + ci
    xt = jnp.transpose(x, (0, 2, 3, 1)).astype(jnp.float32)            # (B,H,W,CIN)
    slabs = jnp.stack([xt[:, ki:ki + HO1] for ki in range(K)], axis=2)  # (B,HO1,K,W,CIN)
    slabs = slabs.reshape(B, HO1, K, W * CIN)
    slabs = jnp.pad(slabs, ((0, 0), (0, 0), (0, 0), (0, KBLK - W * CIN)))
    x1 = slabs.reshape(B * HO1, X1K)                                    # (32, 192)

    args = (x1, wp["s1a"], wp["s1b"], wp["s2a"], wp["s2b"],
            wp["w1"], wp["b1"], wp["w2"], wp["b2"],
            wp["wf1"], wp["bf1"], wp["wf2"], wp["bf2"], wp["wo"], wp["bo"])

    out = pl.pallas_call(
        _cnn_kernel,
        out_shape=jax.ShapeDtypeStruct((B, LANES), jnp.float32),
        grid=(1,),
        in_specs=[_fullblock(a.shape) for a in args],
        out_specs=_fullblock((B, LANES)),
        scratch_shapes=[
            pltpu.VMEM((B * HP1, LANES), jnp.float32),   # p1: pool1 output
            pltpu.VMEM((A2PAD, A2_COLS), jnp.float32),   # a2: conv2 activations
            pltpu.VMEM((8, LANES), jnp.float32),         # fcp: pool2 rows (h*B+b)
        ],
        compiler_params=pltpu.CompilerParams(
            dimension_semantics=("arbitrary",)),
    )(*args)
    return out[:, :NC]


# --------------------------- pure-JAX reference ----------------------------
def reference_forward(x, p):
    def conv(x, w, b):
        y = lax.conv_general_dilated(
            x, w, (1, 1), "VALID",
            dimension_numbers=("NCHW", "OIHW", "NCHW"),
            precision=lax.Precision.HIGHEST)
        return y + b.reshape(1, -1, 1, 1)

    def pool(x):
        return lax.reduce_window(x, -jnp.inf, lax.max,
                                 (1, 1, 2, 2), (1, 1, 2, 2), "VALID")

    act = (jax.nn.sigmoid if ACTIVATION == "sigmoid"
           else lambda v: jnp.maximum(v, 0.0))
    h = pool(act(conv(x, p["w1"], p["b1"])))
    h = pool(act(conv(h, p["w2"], p["b2"])))
    flat = h.reshape(h.shape[0], -1)
    mm = lambda a, b: jnp.dot(a, b, precision=lax.Precision.HIGHEST)
    h = act(mm(flat, p["fc1_w"].T) + p["fc1_b"])
    h = act(mm(h, p["fc2_w"].T) + p["fc2_b"])
    return mm(h, p["out_w"].T) + p["out_b"]


# ---------------------------- init + self-test -----------------------------
def init_params(key):
    ks = jax.random.split(key, 10)

    def u(kk, shape, fan_in):
        bound = 1.0 / np.sqrt(fan_in)
        return jax.random.uniform(kk, shape, jnp.float32, -bound, bound)

    return {
        "w1": u(ks[0], (C1, CIN, K, K), CIN * K * K),
        "b1": u(ks[1], (C1,), CIN * K * K),
        "w2": u(ks[2], (C2, C1, K, K), C1 * K * K),
        "b2": u(ks[3], (C2,), C1 * K * K),
        "fc1_w": u(ks[4], (H1, C2 * K * K), C2 * K * K),
        "fc1_b": u(ks[5], (H1,), C2 * K * K),
        "fc2_w": u(ks[6], (H2, H1), H1),
        "fc2_b": u(ks[7], (H2,), H1),
        "out_w": u(ks[8], (NC, H2), H2),
        "out_b": u(ks[9], (NC,), H2),
    }


if __name__ == "__main__":
    # CNN(in_chanels=3, out_chanels_1=8, out_chanels_2=16, kernel_size=3,
    #     pooling_kernel_size=2, hidden_size_1=32, hidden_size_2=16,
    #     n_classes=10, activation='relu'); 18x18 input so the pooled map is
    #     3x3 = kernel_size x kernel_size, matching fc1's in_features.
    key = jax.random.PRNGKey(0)
    k_x, k_p = jax.random.split(key)
    x = jax.random.normal(k_x, (B, CIN, H, W), jnp.float32)
    params = init_params(k_p)
    wp = prepare_params(params)            # one-time weight repack (hoisted)

    out = jax.block_until_ready(cnn_forward(x, wp))
    ref = jax.block_until_ready(reference_forward(x, params))

    assert out.shape == (B, NC), out.shape
    np.testing.assert_allclose(np.asarray(out), np.asarray(ref),
                               rtol=1e-3, atol=1e-3)
    print("KERNEL_OK")
</pallas_src>

<mosaic_0001>
module attributes {stable_mosaic.version = 11 : i64} {
  func.func @_cnn_kernel(%arg0: i32, %arg1: memref<32x192xf32, #tpu.memory_space<vmem>>, %arg2: memref<16x32xf32, #tpu.memory_space<vmem>>, %arg3: memref<16x32xf32, #tpu.memory_space<vmem>>, %arg4: memref<8x16xf32, #tpu.memory_space<vmem>>, %arg5: memref<8x16xf32, #tpu.memory_space<vmem>>, %arg6: memref<192x256xf32, #tpu.memory_space<vmem>>, %arg7: memref<1x256xf32, #tpu.memory_space<vmem>>, %arg8: memref<3x128x256xf32, #tpu.memory_space<vmem>>, %arg9: memref<1x256xf32, #tpu.memory_space<vmem>>, %arg10: memref<3x128x32xf32, #tpu.memory_space<vmem>>, %arg11: memref<1x32xf32, #tpu.memory_space<vmem>>, %arg12: memref<32x16xf32, #tpu.memory_space<vmem>>, %arg13: memref<1x16xf32, #tpu.memory_space<vmem>>, %arg14: memref<16x128xf32, #tpu.memory_space<vmem>>, %arg15: memref<1x128xf32, #tpu.memory_space<vmem>>, %arg16: memref<2x128xf32, #tpu.memory_space<vmem>>, %arg17: memref<16x128xf32, #tpu.memory_space<vmem>>, %arg18: memref<16x256xf32, #tpu.memory_space<vmem>>, %arg19: memref<8x128xf32, #tpu.memory_space<vmem>>) attributes {dimension_semantics = [#tpu.dimension_semantics<arbitrary>], iteration_bounds = array<i64: 1>, scalar_prefetch = 0 : i64, scratch_operands = 3 : i64, tpu.core_type = #tpu.core_type<tc>, window_params = [{pipeline_mode = #tpu.pipeline_mode<synchronous>, transform_indices = @transform_0, window_bounds = array<i64: 32, 192>}, {pipeline_mode = #tpu.pipeline_mode<synchronous>, transform_indices = @transform_1, window_bounds = array<i64: 16, 32>}, {pipeline_mode = #tpu.pipeline_mode<synchronous>, transform_indices = @transform_2, window_bounds = array<i64: 16, 32>}, {pipeline_mode = #tpu.pipeline_mode<synchronous>, transform_indices = @transform_3, window_bounds = array<i64: 8, 16>}, {pipeline_mode = #tpu.pipeline_mode<synchronous>, transform_indices = @transform_4, window_bounds = array<i64: 8, 16>}, {pipeline_mode = #tpu.pipeline_mode<synchronous>, transform_indices = @transform_5, window_bounds = array<i64: 192, 256>}, {pipeline_mode = #tpu.pipeline_mode<synchronous>, transform_indices = @transform_6, window_bounds = array<i64: 1, 256>}, {pipeline_mode = #tpu.pipeline_mode<synchronous>, transform_indices = @transform_7, window_bounds = array<i64: 3, 128, 256>}, {pipeline_mode = #tpu.pipeline_mode<synchronous>, transform_indices = @transform_8, window_bounds = array<i64: 1, 256>}, {pipeline_mode = #tpu.pipeline_mode<synchronous>, transform_indices = @transform_9, window_bounds = array<i64: 3, 128, 32>}, {pipeline_mode = #tpu.pipeline_mode<synchronous>, transform_indices = @transform_10, window_bounds = array<i64: 1, 32>}, {pipeline_mode = #tpu.pipeline_mode<synchronous>, transform_indices = @transform_11, window_bounds = array<i64: 32, 16>}, {pipeline_mode = #tpu.pipeline_mode<synchronous>, transform_indices = @transform_12, window_bounds = array<i64: 1, 16>}, {pipeline_mode = #tpu.pipeline_mode<synchronous>, transform_indices = @transform_13, window_bounds = array<i64: 16, 128>}, {pipeline_mode = #tpu.pipeline_mode<synchronous>, transform_indices = @transform_14, window_bounds = array<i64: 1, 128>}, {pipeline_mode = #tpu.pipeline_mode<synchronous>, transform_indices = @transform_15, window_bounds = array<i64: 2, 128>}]} {
    %c0 = arith.constant 0 : index
    %c0_0 = arith.constant 0 : index
    %0 = vector.load %arg1[%c0, %c0_0] : memref<32x192xf32, #tpu.memory_space<vmem>>, vector<32x192xf32>
    %c0_1 = arith.constant 0 : index
    %c0_2 = arith.constant 0 : index
    %1 = vector.load %arg6[%c0_1, %c0_2] : memref<192x256xf32, #tpu.memory_space<vmem>>, vector<192x256xf32>
    %cst = arith.constant dense<0.000000e+00> : vector<32x256xf32>
    %2 = tpu.matmul %0, %1, %cst {dimension_numbers = #tpu.dot_dimension_numbers<[1], [0], [0], [1], [0, 0, 1, 1], [], []>} : vector<32x192xf32>, vector<192x256xf32>, vector<32x256xf32> -> vector<32x256xf32>
    %c0_3 = arith.constant 0 : index
    %c0_4 = arith.constant 0 : index
    %3 = vector.load %arg7[%c0_3, %c0_4] : memref<1x256xf32, #tpu.memory_space<vmem>>, vector<1x256xf32>
    %4 = vector.broadcast %3 : vector<1x256xf32> to vector<32x256xf32>
    %5 = arith.addf %2, %4 : vector<32x256xf32>
    %cst_5 = arith.constant 0.000000e+00 : f32
    %6 = vector.broadcast %cst_5 : f32 to vector<32x256xf32>
    %7 = arith.maximumf %5, %6 : vector<32x256xf32>
    %8 = vector.extract_strided_slice %7 {offsets = [0, 0], sizes = [32, 128], strides = [1, 1]} : vector<32x256xf32> to vector<32x128xf32>
    %9 = vector.extract_strided_slice %7 {offsets = [0, 128], sizes = [32, 128], strides = [1, 1]} : vector<32x256xf32> to vector<32x128xf32>
    %10 = arith.maximumf %8, %9 : vector<32x128xf32>
    %c0_6 = arith.constant 0 : index
    %c0_7 = arith.constant 0 : index
    %11 = vector.load %arg2[%c0_6, %c0_7] : memref<16x32xf32, #tpu.memory_space<vmem>>, vector<16x32xf32>
    %cst_8 = arith.constant dense<0.000000e+00> : vector<16x128xf32>
    %12 = tpu.matmul %11, %10, %cst_8 {dimension_numbers = #tpu.dot_dimension_numbers<[1], [0], [0], [1], [0, 0, 1, 1], [], []>} : vector<16x32xf32>, vector<32x128xf32>, vector<16x128xf32> -> vector<16x128xf32>
    %c0_9 = arith.constant 0 : index
    %c0_10 = arith.constant 0 : index
    %13 = vector.load %arg3[%c0_9, %c0_10] : memref<16x32xf32, #tpu.memory_space<vmem>>, vector<16x32xf32>
    %cst_11 = arith.constant dense<0.000000e+00> : vector<16x128xf32>
    %14 = tpu.matmul %13, %10, %cst_11 {dimension_numbers = #tpu.dot_dimension_numbers<[1], [0], [0], [1], [0, 0, 1, 1], [], []>} : vector<16x32xf32>, vector<32x128xf32>, vector<16x128xf32> -> vector<16x128xf32>
    %15 = arith.maximumf %12, %14 : vector<16x128xf32>
    %c0_12 = arith.constant 0 : index
    %c0_13 = arith.constant 0 : index
    %16 = vector.load %arg17[%c0_12, %c0_13] : memref<16x128xf32, #tpu.memory_space<vmem>>, vector<16x128xf32>
    tpu.vector_store %arg17[%c0_12, %c0_13], %15 {strides = array<i32>} : memref<16x128xf32, #tpu.memory_space<vmem>>, vector<16x128xf32>,
    %c0_14 = arith.constant 0 : index
    %c0_15 = arith.constant 0 : index
    %17 = vector.load %arg17[%c0_14, %c0_15] : memref<16x128xf32, #tpu.memory_space<vmem>>, vector<14x128xf32>
    %c0_16 = arith.constant 0 : index
    %c0_17 = arith.constant 0 : index
    %c0_18 = arith.constant 0 : index
    %18 = vector.load %arg8[%c0_16, %c0_17, %c0_18] : memref<3x128x256xf32, #tpu.memory_space<vmem>>, vector<1x128x256xf32>
    %19 = vector.shape_cast %18 : vector<1x128x256xf32> to vector<128x256xf32>
    %cst_19 = arith.constant dense<0.000000e+00> : vector<14x256xf32>
    %20 = tpu.matmul %17, %19, %cst_19 {dimension_numbers = #tpu.dot_dimension_numbers<[1], [0], [0], [1], [0, 0, 1, 1], [], []>} : vector<14x128xf32>, vector<128x256xf32>, vector<14x256xf32> -> vector<14x256xf32>
    %c1 = arith.constant 1 : index
    %c0_20 = arith.constant 0 : index
    %21 = vector.load %arg17[%c1, %c0_20] : memref<16x128xf32, #tpu.memory_space<vmem>>, vector<14x128xf32>
    %c1_21 = arith.constant 1 : index
    %c0_22 = arith.constant 0 : index
    %c0_23 = arith.constant 0 : index
    %22 = vector.load %arg8[%c1_21, %c0_22, %c0_23] : memref<3x128x256xf32, #tpu.memory_space<vmem>>, vector<1x128x256xf32>
    %23 = vector.shape_cast %22 : vector<1x128x256xf32> to vector<128x256xf32>
    %cst_24 = arith.constant dense<0.000000e+00> : vector<14x256xf32>
    %24 = tpu.matmul %21, %23, %cst_24 {dimension_numbers = #tpu.dot_dimension_numbers<[1], [0], [0], [1], [0, 0, 1, 1], [], []>} : vector<14x128xf32>, vector<128x256xf32>, vector<14x256xf32> -> vector<14x256xf32>
    %25 = arith.addf %20, %24 : vector<14x256xf32>
    %c2 = arith.constant 2 : index
    %c0_25 = arith.constant 0 : index
    %26 = vector.load %arg17[%c2, %c0_25] : memref<16x128xf32, #tpu.memory_space<vmem>>, vector<14x128xf32>
    %c2_26 = arith.constant 2 : index
    %c0_27 = arith.constant 0 : index
    %c0_28 = arith.constant 0 : index
    %27 = vector.load %arg8[%c2_26, %c0_27, %c0_28] : memref<3x128x256xf32, #tpu.memory_space<vmem>>, vector<1x128x256xf32>
    %28 = vector.shape_cast %27 : vector<1x128x256xf32> to vector<128x256xf32>
    %cst_29 = arith.constant dense<0.000000e+00> : vector<14x256xf32>
    %29 = tpu.matmul %26, %28, %cst_29 {dimension_numbers = #tpu.dot_dimension_numbers<[1], [0], [0], [1], [0, 0, 1, 1], [], []>} : vector<14x128xf32>, vector<128x256xf32>, vector<14x256xf32> -> vector<14x256xf32>
    %30 = arith.addf %25, %29 : vector<14x256xf32>
    %c0_30 = arith.constant 0 : index
    %c0_31 = arith.constant 0 : index
    %31 = vector.load %arg9[%c0_30, %c0_31] : memref<1x256xf32, #tpu.memory_space<vmem>>, vector<1x256xf32>
    %32 = vector.broadcast %31 : vector<1x256xf32> to vector<14x256xf32>
    %33 = arith.addf %30, %32 : vector<14x256xf32>
    %cst_32 = arith.constant 0.000000e+00 : f32
    %34 = vector.broadcast %cst_32 : f32 to vector<14x256xf32>
    %35 = arith.maximumf %33, %34 : vector<14x256xf32>
    %c0_33 = arith.constant 0 : index
    %c0_34 = arith.constant 0 : index
    %36 = vector.load %arg18[%c0_33, %c0_34] : memref<16x256xf32, #tpu.memory_space<vmem>>, vector<14x256xf32>
    tpu.vector_store %arg18[%c0_33, %c0_34], %35 {strides = array<i32>} : memref<16x256xf32, #tpu.memory_space<vmem>>, vector<14x256xf32>,
    %cst_35 = arith.constant 0.000000e+00 : f32
    %37 = vector.broadcast %cst_35 : f32 to vector<2x256xf32>
    %c14 = arith.constant 14 : index
    %c0_36 = arith.constant 0 : index
    %38 = vector.load %arg18[%c14, %c0_36] : memref<16x256xf32, #tpu.memory_space<vmem>>, vector<2x256xf32>
    tpu.vector_store %arg18[%c14, %c0_36], %37 {strides = array<i32>} : memref<16x256xf32, #tpu.memory_space<vmem>>, vector<2x256xf32>,
    %c0_37 = arith.constant 0 : index
    %c0_38 = arith.constant 0 : index
    %39 = vector.load %arg18[%c0_37, %c0_38] : memref<16x256xf32, #tpu.memory_space<vmem>>, vector<16x256xf32>
    %40 = vector.extract_strided_slice %39 {offsets = [0, 0], sizes = [16, 128], strides = [1, 1]} : vector<16x256xf32> to vector<16x128xf32>
    %41 = vector.extract_strided_slice %39 {offsets = [0, 128], sizes = [16, 128], strides = [1, 1]} : vector<16x256xf32> to vector<16x128xf32>
    %42 = arith.maximumf %40, %41 : vector<16x128xf32>
    %c0_39 = arith.constant 0 : index
    %c0_40 = arith.constant 0 : index
    %43 = vector.load %arg4[%c0_39, %c0_40] : memref<8x16xf32, #tpu.memory_space<vmem>>, vector<8x16xf32>
    %cst_41 = arith.constant dense<0.000000e+00> : vector<8x128xf32>
    %44 = tpu.matmul %43, %42, %cst_41 {dimension_numbers = #tpu.dot_dimension_numbers<[1], [0], [0], [1], [0, 0, 1, 1], [], []>} : vector<8x16xf32>, vector<16x128xf32>, vector<8x128xf32> -> vector<8x128xf32>
    %c0_42 = arith.constant 0 : index
    %c0_43 = arith.constant 0 : index
    %45 = vector.load %arg5[%c0_42, %c0_43] : memref<8x16xf32, #tpu.memory_space<vmem>>, vector<8x16xf32>
    %cst_44 = arith.constant dense<0.000000e+00> : vector<8x128xf32>
    %46 = tpu.matmul %45, %42, %cst_44 {dimension_numbers = #tpu.dot_dimension_numbers<[1], [0], [0], [1], [0, 0, 1, 1], [], []>} : vector<8x16xf32>, vector<16x128xf32>, vector<8x128xf32> -> vector<8x128xf32>
    %47 = arith.maximumf %44, %46 : vector<8x128xf32>
    %c0_45 = arith.constant 0 : index
    %c0_46 = arith.constant 0 : index
    %48 = vector.load %arg19[%c0_45, %c0_46] : memref<8x128xf32, #tpu.memory_space<vmem>>, vector<8x128xf32>
    tpu.vector_store %arg19[%c0_45, %c0_46], %47 {strides = array<i32>} : memref<8x128xf32, #tpu.memory_space<vmem>>, vector<8x128xf32>,
    %c0_47 = arith.constant 0 : index
    %c0_48 = arith.constant 0 : index
    %49 = vector.load %arg19[%c0_47, %c0_48] : memref<8x128xf32, #tpu.memory_space<vmem>>, vector<2x128xf32>
    %c0_49 = arith.constant 0 : index
    %c0_50 = arith.constant 0 : index
    %c0_51 = arith.constant 0 : index
    %50 = vector.load %arg10[%c0_49, %c0_50, %c0_51] : memref<3x128x32xf32, #tpu.memory_space<vmem>>, vector<1x128x32xf32>
    %51 = vector.shape_cast %50 : vector<1x128x32xf32> to vector<128x32xf32>
    %cst_52 = arith.constant dense<0.000000e+00> : vector<2x32xf32>
    %52 = tpu.matmul %49, %51, %cst_52 {dimension_numbers = #tpu.dot_dimension_numbers<[1], [0], [0], [1], [0, 0, 1, 1], [], []>} : vector<2x128xf32>, vector<128x32xf32>, vector<2x32xf32> -> vector<2x32xf32>
    %c2_53 = arith.constant 2 : index
    %c0_54 = arith.constant 0 : index
    %53 = vector.load %arg19[%c2_53, %c0_54] : memref<8x128xf32, #tpu.memory_space<vmem>>, vector<2x128xf32>
    %c1_55 = arith.constant 1 : index
    %c0_56 = arith.constant 0 : index
    %c0_57 = arith.constant 0 : index
    %54 = vector.load %arg10[%c1_55, %c0_56, %c0_57] : memref<3x128x32xf32, #tpu.memory_space<vmem>>, vector<1x128x32xf32>
    %55 = vector.shape_cast %54 : vector<1x128x32xf32> to vector<128x32xf32>
    %cst_58 = arith.constant dense<0.000000e+00> : vector<2x32xf32>
    %56 = tpu.matmul %53, %55, %cst_58 {dimension_numbers = #tpu.dot_dimension_numbers<[1], [0], [0], [1], [0, 0, 1, 1], [], []>} : vector<2x128xf32>, vector<128x32xf32>, vector<2x32xf32> -> vector<2x32xf32>
    %57 = arith.addf %52, %56 : vector<2x32xf32>
    %c4 = arith.constant 4 : index
    %c0_59 = arith.constant 0 : index
    %58 = vector.load %arg19[%c4, %c0_59] : memref<8x128xf32, #tpu.memory_space<vmem>>, vector<2x128xf32>
    %c2_60 = arith.constant 2 : index
    %c0_61 = arith.constant 0 : index
    %c0_62 = arith.constant 0 : index
    %59 = vector.load %arg10[%c2_60, %c0_61, %c0_62] : memref<3x128x32xf32, #tpu.memory_space<vmem>>, vector<1x128x32xf32>
    %60 = vector.shape_cast %59 : vector<1x128x32xf32> to vector<128x32xf32>
    %cst_63 = arith.constant dense<0.000000e+00> : vector<2x32xf32>
    %61 = tpu.matmul %58, %60, %cst_63 {dimension_numbers = #tpu.dot_dimension_numbers<[1], [0], [0], [1], [0, 0, 1, 1], [], []>} : vector<2x128xf32>, vector<128x32xf32>, vector<2x32xf32> -> vector<2x32xf32>
    %62 = arith.addf %57, %61 : vector<2x32xf32>
    %c0_64 = arith.constant 0 : index
    %c0_65 = arith.constant 0 : index
    %63 = vector.load %arg11[%c0_64, %c0_65] : memref<1x32xf32, #tpu.memory_space<vmem>>, vector<1x32xf32>
    %64 = vector.broadcast %63 : vector<1x32xf32> to vector<2x32xf32>
    %65 = arith.addf %62, %64 : vector<2x32xf32>
    %cst_66 = arith.constant 0.000000e+00 : f32
    %66 = vector.broadcast %cst_66 : f32 to vector<2x32xf32>
    %67 = arith.maximumf %65, %66 : vector<2x32xf32>
    %c0_67 = arith.constant 0 : index
    %c0_68 = arith.constant 0 : index
    %68 = vector.load %arg12[%c0_67, %c0_68] : memref<32x16xf32, #tpu.memory_space<vmem>>, vector<32x16xf32>
    %cst_69 = arith.constant dense<0.000000e+00> : vector<2x16xf32>
    %69 = tpu.matmul %67, %68, %cst_69 {dimension_numbers = #tpu.dot_dimension_numbers<[1], [0], [0], [1], [0, 0, 1, 1], [], []>} : vector<2x32xf32>, vector<32x16xf32>, vector<2x16xf32> -> vector<2x16xf32>
    %c0_70 = arith.constant 0 : index
    %c0_71 = arith.constant 0 : index
    %70 = vector.load %arg13[%c0_70, %c0_71] : memref<1x16xf32, #tpu.memory_space<vmem>>, vector<1x16xf32>
    %71 = vector.broadcast %70 : vector<1x16xf32> to vector<2x16xf32>
    %72 = arith.addf %69, %71 : vector<2x16xf32>
    %cst_72 = arith.constant 0.000000e+00 : f32
    %73 = vector.broadcast %cst_72 : f32 to vector<2x16xf32>
    %74 = arith.maximumf %72, %73 : vector<2x16xf32>
    %c0_73 = arith.constant 0 : index
    %c0_74 = arith.constant 0 : index
    %75 = vector.load %arg14[%c0_73, %c0_74] : memref<16x128xf32, #tpu.memory_space<vmem>>, vector<16x128xf32>
    %cst_75 = arith.constant dense<0.000000e+00> : vector<2x128xf32>
    %76 = tpu.matmul %74, %75, %cst_75 {dimension_numbers = #tpu.dot_dimension_numbers<[1], [0], [0], [1], [0, 0, 1, 1], [], []>} : vector<2x16xf32>, vector<16x128xf32>, vector<2x128xf32> -> vector<2x128xf32>
    %c0_76 = arith.constant 0 : index
    %c0_77 = arith.constant 0 : index
    %77 = vector.load %arg15[%c0_76, %c0_77] : memref<1x128xf32, #tpu.memory_space<vmem>>, vector<1x128xf32>
    %78 = vector.broadcast %77 : vector<1x128xf32> to vector<2x128xf32>
    %79 = arith.addf %76, %78 : vector<2x128xf32>
    %c0_78 = arith.constant 0 : index
    %c0_79 = arith.constant 0 : index
    %80 = vector.load %arg16[%c0_78, %c0_79] : memref<2x128xf32, #tpu.memory_space<vmem>>, vector<2x128xf32>
    tpu.vector_store %arg16[%c0_78, %c0_79], %79 {strides = array<i32>} : memref<2x128xf32, #tpu.memory_space<vmem>>, vector<2x128xf32>,
    return
  }
  func.func @transform_0(%arg0: i32) -> (i32, i32) {
    %c0_i32 = arith.constant 0 : i32
    %c0_i32_0 = arith.constant 0 : i32
    %c0_i32_1 = arith.constant 0 : i32
    return %c0_i32, %c0_i32_0 : i32, i32
  }
  func.func @transform_1(%arg0: i32) -> (i32, i32) {
    %c0_i32 = arith.constant 0 : i32
    %c0_i32_0 = arith.constant 0 : i32
    %c0_i32_1 = arith.constant 0 : i32
    return %c0_i32, %c0_i32_0 : i32, i32
  }
  func.func @transform_2(%arg0: i32) -> (i32, i32) {
    %c0_i32 = arith.constant 0 : i32
    %c0_i32_0 = arith.constant 0 : i32
    %c0_i32_1 = arith.constant 0 : i32
    return %c0_i32, %c0_i32_0 : i32, i32
  }
  func.func @transform_3(%arg0: i32) -> (i32, i32) {
    %c0_i32 = arith.constant 0 : i32
    %c0_i32_0 = arith.constant 0 : i32
    %c0_i32_1 = arith.constant 0 : i32
    return %c0_i32, %c0_i32_0 : i32, i32
  }
  func.func @transform_4(%arg0: i32) -> (i32, i32) {
    %c0_i32 = arith.constant 0 : i32
    %c0_i32_0 = arith.constant 0 : i32
    %c0_i32_1 = arith.constant 0 : i32
    return %c0_i32, %c0_i32_0 : i32, i32
  }
  func.func @transform_5(%arg0: i32) -> (i32, i32) {
    %c0_i32 = arith.constant 0 : i32
    %c0_i32_0 = arith.constant 0 : i32
    %c0_i32_1 = arith.constant 0 : i32
    return %c0_i32, %c0_i32_0 : i32, i32
  }
  func.func @transform_6(%arg0: i32) -> (i32, i32) {
    %c0_i32 = arith.constant 0 : i32
    %c0_i32_0 = arith.constant 0 : i32
    %c0_i32_1 = arith.constant 0 : i32
    return %c0_i32, %c0_i32_0 : i32, i32
  }
  func.func @transform_7(%arg0: i32) -> (i32, i32, i32) {
    %c0_i32 = arith.constant 0 : i32
    %c0_i32_0 = arith.constant 0 : i32
    %c0_i32_1 = arith.constant 0 : i32
    %c0_i32_2 = arith.constant 0 : i32
    return %c0_i32, %c0_i32_0, %c0_i32_1 : i32, i32, i32
  }
  func.func @transform_8(%arg0: i32) -> (i32, i32) {
    %c0_i32 = arith.constant 0 : i32
    %c0_i32_0 = arith.constant 0 : i32
    %c0_i32_1 = arith.constant 0 : i32
    return %c0_i32, %c0_i32_0 : i32, i32
  }
  func.func @transform_9(%arg0: i32) -> (i32, i32, i32) {
    %c0_i32 = arith.constant 0 : i32
    %c0_i32_0 = arith.constant 0 : i32
    %c0_i32_1 = arith.constant 0 : i32
    %c0_i32_2 = arith.constant 0 : i32
    return %c0_i32, %c0_i32_0, %c0_i32_1 : i32, i32, i32
  }
  func.func @transform_10(%arg0: i32) -> (i32, i32) {
    %c0_i32 = arith.constant 0 : i32
    %c0_i32_0 = arith.constant 0 : i32
    %c0_i32_1 = arith.constant 0 : i32
    return %c0_i32, %c0_i32_0 : i32, i32
  }
  func.func @transform_11(%arg0: i32) -> (i32, i32) {
    %c0_i32 = arith.constant 0 : i32
    %c0_i32_0 = arith.constant 0 : i32
    %c0_i32_1 = arith.constant 0 : i32
    return %c0_i32, %c0_i32_0 : i32, i32
  }
  func.func @transform_12(%arg0: i32) -> (i32, i32) {
    %c0_i32 = arith.constant 0 : i32
    %c0_i32_0 = arith.constant 0 : i32
    %c0_i32_1 = arith.constant 0 : i32
    return %c0_i32, %c0_i32_0 : i32, i32
  }
  func.func @transform_13(%arg0: i32) -> (i32, i32) {
    %c0_i32 = arith.constant 0 : i32
    %c0_i32_0 = arith.constant 0 : i32
    %c0_i32_1 = arith.constant 0 : i32
    return %c0_i32, %c0_i32_0 : i32, i32
  }
  func.func @transform_14(%arg0: i32) -> (i32, i32) {
    %c0_i32 = arith.constant 0 : i32
    %c0_i32_0 = arith.constant 0 : i32
    %c0_i32_1 = arith.constant 0 : i32
    return %c0_i32, %c0_i32_0 : i32, i32
  }
  func.func @transform_15(%arg0: i32) -> (i32, i32) {
    %c0_i32 = arith.constant 0 : i32
    %c0_i32_0 = arith.constant 0 : i32
    %c0_i32_1 = arith.constant 0 : i32
    return %c0_i32, %c0_i32_0 : i32, i32
  }
}

</mosaic_0001>

<llo_original>
// kernel: cnn_forward.1
$region0: #{cnn_forward.1}
  #allocation0 [shape = 'u32[]', space=smem, size = 0x4, offset = 0x4, fixed_abs, tag = 'smem constant byte address 0x4 - core index']
  #allocation1 [shape = 'u32[144,128]{1,0:T(1,128)}', space=vmem, size = 0x12000, scoped, tag = 'internal scratch']
  #allocation2 [shape = 'f32[16,128]{1,0:T(8,128)}', space=vmem, size = 0x2000, scoped, tag = 'scratch operand']
  #allocation3 [shape = 'f32[16,256]{1,0:T(8,128)}', space=vmem, size = 0x4000, scoped, tag = 'scratch operand']
  #allocation4 [shape = 'f32[8,128]{1,0:T(8,128)}', space=vmem, size = 0x1000, scoped, tag = 'scratch operand']
  %s0 = inlined_call_operand.vmem [shape: f32[32,192], index: 0, kind: input, shape index: {}]
  %s1 = inlined_call_operand.vmem [shape: f32[16,32], index: 1, kind: input, shape index: {}]
  %s2 = inlined_call_operand.vmem [shape: f32[16,32], index: 2, kind: input, shape index: {}]
  %s3 = inlined_call_operand.vmem [shape: f32[8,16], index: 3, kind: input, shape index: {}]
  %s4 = inlined_call_operand.vmem [shape: f32[8,16], index: 4, kind: input, shape index: {}]
  %s5 = inlined_call_operand.vmem [shape: f32[192,256], index: 5, kind: input, shape index: {}]
  %s6 = inlined_call_operand.vmem [shape: f32[1,256], index: 6, kind: input, shape index: {}]
  %s7 = inlined_call_operand.vmem [shape: f32[3,128,256], index: 7, kind: input, shape index: {}]
  %s8 = inlined_call_operand.vmem [shape: f32[1,256], index: 8, kind: input, shape index: {}]
  %s9 = inlined_call_operand.vmem [shape: f32[3,128,32], index: 9, kind: input, shape index: {}]
  %s10 = inlined_call_operand.vmem [shape: f32[1,32], index: 10, kind: input, shape index: {}]
  %s11 = inlined_call_operand.vmem [shape: f32[32,16], index: 11, kind: input, shape index: {}]
  %s12 = inlined_call_operand.vmem [shape: f32[1,16], index: 12, kind: input, shape index: {}]
  %s13 = inlined_call_operand.vmem [shape: f32[16,128], index: 13, kind: input, shape index: {}]
  %s14 = inlined_call_operand.vmem [shape: f32[1,128], index: 14, kind: input, shape index: {}]
  %s15 = inlined_call_operand.hbm [shape: f32[2,128], index: 15, kind: output, shape index: {}]
  %s16 = sld [smem:[#allocation0]]
  $region70: #{cnn_forward.1} parent=0
    _
  %s18 = ssub.s32 1, %s16
  %s19 = scalar_select 0, %s18, %s16
  $region1: #{cnn_forward.1} parent=0
    #allocation5 [shape = 'u8[1024]{0}', space=vmem, size = 0x400, scoped, tag = 'output window, operand 0, single buffered']
    #allocation6 [shape = 's32[1]{0}', space=sflag, size = 0x4, scoped, tag = 'scoped memory for cnn_forward.1']
    %20 = vsyncpa [#allocation6], 0
    // Predicated region
    $region2: #{cnn_forward.1} parent=1 // pred_check
      _
    $region3: #{cnn_forward.1} parent=1 // pred_check_branch
      %22 = sbr.rel (0) target = $region5
    $region4: #{cnn_forward.1} parent=1 // pred_region
      _
    $region5: #{cnn_forward.1} parent=1 // pred_fallthru
      _
    // Predicated region
    $region6: #{cnn_forward.1} parent=1 // pred_check
      _
    $region7: #{cnn_forward.1} parent=1 // pred_check_branch
      %24 = sbr.rel (0) target = $region9
    $region8: #{cnn_forward.1} parent=1 // pred_region
      _
    $region9: #{cnn_forward.1} parent=1 // pred_fallthru
      _
    // Predicated region
    $region10: #{cnn_forward.1} parent=1 // pred_check
      _
    $region11: #{cnn_forward.1} parent=1 // pred_check_branch
      %26 = sbr.rel (0) target = $region13
    $region12: #{cnn_forward.1} parent=1 // pred_region
      _
    $region13: #{cnn_forward.1} parent=1 // pred_fallthru
      _
    // Predicated region
    $region14: #{cnn_forward.1} parent=1 // pred_check
      _
    $region15: #{cnn_forward.1} parent=1 // pred_check_branch
      %28 = sbr.rel (0) target = $region17
    $region16: #{cnn_forward.1} parent=1 // pred_region
      _
    $region17: #{cnn_forward.1} parent=1 // pred_fallthru
      _
    // Predicated region
    $region18: #{cnn_forward.1} parent=1 // pred_check
      _
    $region19: #{cnn_forward.1} parent=1 // pred_check_branch
      %30 = sbr.rel (0) target = $region21
    $region20: #{cnn_forward.1} parent=1 // pred_region
      _
    $region21: #{cnn_forward.1} parent=1 // pred_fallthru
      _
    // Predicated region
    $region22: #{cnn_forward.1} parent=1 // pred_check
      _
    $region23: #{cnn_forward.1} parent=1 // pred_check_branch
      %32 = sbr.rel (0) target = $region25
    $region24: #{cnn_forward.1} parent=1 // pred_region
      _
    $region25: #{cnn_forward.1} parent=1 // pred_fallthru
      _
    // Predicated region
    $region26: #{cnn_forward.1} parent=1 // pred_check
      _
    $region27: #{cnn_forward.1} parent=1 // pred_check_branch
      %34 = sbr.rel (0) target = $region29
    $region28: #{cnn_forward.1} parent=1 // pred_region
      _
    $region29: #{cnn_forward.1} parent=1 // pred_fallthru
      _
    // Predicated region
    $region30: #{cnn_forward.1} parent=1 // pred_check
      _
    $region31: #{cnn_forward.1} parent=1 // pred_check_branch
      %36 = sbr.rel (0) target = $region33
    $region32: #{cnn_forward.1} parent=1 // pred_region
      _
    $region33: #{cnn_forward.1} parent=1 // pred_fallthru
      _
    // Predicated region
    $region34: #{cnn_forward.1} parent=1 // pred_check
      _
    $region35: #{cnn_forward.1} parent=1 // pred_check_branch
      %38 = sbr.rel (0) target = $region37
    $region36: #{cnn_forward.1} parent=1 // pred_region
      _
    $region37: #{cnn_forward.1} parent=1 // pred_fallthru
      _
    // Predicated region
    $region38: #{cnn_forward.1} parent=1 // pred_check
      _
    $region39: #{cnn_forward.1} parent=1 // pred_check_branch
      %40 = sbr.rel (0) target = $region41
    $region40: #{cnn_forward.1} parent=1 // pred_region
      _
    $region41: #{cnn_forward.1} parent=1 // pred_fallthru
      _
    // Predicated region
    $region42: #{cnn_forward.1} parent=1 // pred_check
      _
    $region43: #{cnn_forward.1} parent=1 // pred_check_branch
      %42 = sbr.rel (0) target = $region45
    $region44: #{cnn_forward.1} parent=1 // pred_region
      _
    $region45: #{cnn_forward.1} parent=1 // pred_fallthru
      _
    // Predicated region
    $region46: #{cnn_forward.1} parent=1 // pred_check
      _
    $region47: #{cnn_forward.1} parent=1 // pred_check_branch
      %44 = sbr.rel (0) target = $region49
    $region48: #{cnn_forward.1} parent=1 // pred_region
      _
    $region49: #{cnn_forward.1} parent=1 // pred_fallthru
      _
    // Predicated region
    $region50: #{cnn_forward.1} parent=1 // pred_check
      _
    $region51: #{cnn_forward.1} parent=1 // pred_check_branch
      %46 = sbr.rel (0) target = $region53
    $region52: #{cnn_forward.1} parent=1 // pred_region
      _
    $region53: #{cnn_forward.1} parent=1 // pred_fallthru
      _
    // Predicated region
    $region54: #{cnn_forward.1} parent=1 // pred_check
      _
    $region55: #{cnn_forward.1} parent=1 // pred_check_branch
      %48 = sbr.rel (0) target = $region57
    $region56: #{cnn_forward.1} parent=1 // pred_region
      _
    $region57: #{cnn_forward.1} parent=1 // pred_fallthru
      _
    // Predicated region
    $region58: #{cnn_forward.1} parent=1 // pred_check
      _
    $region59: #{cnn_forward.1} parent=1 // pred_check_branch
      %50 = sbr.rel (0) target = $region61
    $region60: #{cnn_forward.1} parent=1 // pred_region
      _
    $region61: #{cnn_forward.1} parent=1 // pred_fallthru
      _
    %v51 = vld [vmem:[%s0] sm:$0xff]
    %v52 = vld [vmem:[%s0 + $0x8] sm:$0xff]
    %v53 = vld [vmem:[%s0 + $0x10] sm:$0xff]
    %v54 = vld [vmem:[%s0 + $0x18] sm:$0xff]
    %v55 = vld [vmem:[%s0 + $0x20] sm:$0xff]
    %v56 = vld [vmem:[%s0 + $0x28] sm:$0xff]
    %v57 = vld [vmem:[%s0 + $0x30] sm:$0xff]
    %v58 = vld [vmem:[%s0 + $0x38] sm:$0xff]
    %v59 = vld [vmem:[%s5] sm:$0xff]
    %v60 = vld [vmem:[%s5 + $0x8] sm:$0xff]
    %v61 = vld [vmem:[%s5 + $0x10] sm:$0xff]
    %v62 = vld [vmem:[%s5 + $0x18] sm:$0xff]
    %v63 = vld [vmem:[%s5 + $0x20] sm:$0xff]
    %v64 = vld [vmem:[%s5 + $0x28] sm:$0xff]
    %v65 = vld [vmem:[%s5 + $0x30] sm:$0xff]
    %v66 = vld [vmem:[%s5 + $0x38] sm:$0xff]
    %v67 = vld [vmem:[%s5 + $0x40] sm:$0xff]
    %v68 = vld [vmem:[%s5 + $0x48] sm:$0xff]
    %v69 = vld [vmem:[%s5 + $0x50] sm:$0xff]
    %v70 = vld [vmem:[%s5 + $0x58] sm:$0xff]
    %v71 = vld [vmem:[%s5 + $0x60] sm:$0xff]
    %v72 = vld [vmem:[%s5 + $0x68] sm:$0xff]
    %v73 = vld [vmem:[%s5 + $0x70] sm:$0xff]
    %v74 = vld [vmem:[%s5 + $0x78] sm:$0xff]
    %v75 = vld [vmem:[%s5 + $0x80] sm:$0xff]
    %v76 = vld [vmem:[%s5 + $0x88] sm:$0xff]
    %v77 = vld [vmem:[%s5 + $0x90] sm:$0xff]
    %v78 = vld [vmem:[%s5 + $0x98] sm:$0xff]
    %v79 = vld [vmem:[%s5 + $0xa0] sm:$0xff]
    %v80 = vld [vmem:[%s5 + $0xa8] sm:$0xff]
    %v81 = vld [vmem:[%s5 + $0xb0] sm:$0xff]
    %v82 = vld [vmem:[%s5 + $0xb8] sm:$0xff]
    %v83 = vld [vmem:[%s5 + $0xc0] sm:$0xff]
    %v84 = vld [vmem:[%s5 + $0xc8] sm:$0xff]
    %v85 = vld [vmem:[%s5 + $0xd0] sm:$0xff]
    %v86 = vld [vmem:[%s5 + $0xd8] sm:$0xff]
    %v87 = vld [vmem:[%s5 + $0xe0] sm:$0xff]
    %v88 = vld [vmem:[%s5 + $0xe8] sm:$0xff]
    %v89 = vld [vmem:[%s5 + $0xf0] sm:$0xff]
    %v90 = vld [vmem:[%s5 + $0xf8] sm:$0xff]
    %v91 = vld [vmem:[%s5 + $0x100] sm:$0xff]
    %v92 = vld [vmem:[%s5 + $0x108] sm:$0xff]
    %v93 = vld [vmem:[%s5 + $0x110] sm:$0xff]
    %v94 = vld [vmem:[%s5 + $0x118] sm:$0xff]
    %v95 = vld [vmem:[%s5 + $0x120] sm:$0xff]
    %v96 = vld [vmem:[%s5 + $0x128] sm:$0xff]
    %v97 = vld [vmem:[%s5 + $0x130] sm:$0xff]
    %v98 = vld [vmem:[%s5 + $0x138] sm:$0xff]
    %v99 = vld [vmem:[%s5 + $0x140] sm:$0xff]
    %v100 = vld [vmem:[%s5 + $0x148] sm:$0xff]
    %v101 = vld [vmem:[%s5 + $0x150] sm:$0xff]
    %v102 = vld [vmem:[%s5 + $0x158] sm:$0xff]
    %v103 = vld [vmem:[%s5 + $0x160] sm:$0xff]
    %v104 = vld [vmem:[%s5 + $0x168] sm:$0xff]
    %v105 = vld [vmem:[%s5 + $0x170] sm:$0xff]
    %v106 = vld [vmem:[%s5 + $0x178] sm:$0xff]
    %v107 = vld [vmem:[%s6] sm:$0x3]
    %v109 = vlaneseq
    %v110 = vshrl.u32 %v109, 7
    %v111 = vsub.s32 0, %v110
    %v112 = vrot.slane %v107, %v111
    %v113 = vlaneseq
    %v114 = vshrl.u32 %v113, 7
    %v115 = vsub.s32 1, %v114
    %v116 = vrot.slane %v107, %v115
    %vm119 = vcmask 523264
    %v121 = vsel %vm119, %v52, 0
    %v124 = vsel %vm119, %v54, 0
    %v127 = vsel %vm119, %v56, 0
    %v130 = vsel %vm119, %v58, 0
    %132 = vmatprep.subr.mxu0 %v60
    %133 = vmatpush1.msra.mxu0 %v59
    %134 = vmatprep.subr.mxu0 %v62
    %135 = vmatpush1.msra.mxu0 %v61
    %136 = vmatprep.subr.mxu0 %v64
    %137 = vmatpush1.msra.mxu0 %v63
    %138 = vmatprep.subr.mxu0 %v66
    %139 = vmatpush1.msra.mxu0 %v65
    %140 = vmatprep.subr.mxu0 %v68
    %141 = vmatpush1.msra.mxu0 %v67
    %142 = vmatprep.subr.mxu0 %v70
    %143 = vmatpush1.msra.mxu0 %v69
    %144 = vmatprep.subr.mxu0 %v72
    %145 = vmatpush1.msra.mxu0 %v71
    %146 = vmatprep.subr.mxu0 %v74
    %147 = vmatpush1.msra.mxu0 %v73
    %148 = vmatprep.subr.mxu0 %v76
    %149 = vmatpush1.msra.mxu0 %v75
    %150 = vmatprep.subr.mxu0 %v78
    %151 = vmatpush1.msra.mxu0 %v77
    %152 = vmatprep.subr.mxu0 %v80
    %153 = vmatpush1.msra.mxu0 %v79
    %154 = vmatprep.subr.mxu0 %v82
    %155 = vmatpush1.msra.mxu0 %v81
    %156 = vmatprep.subr.mxu0 %v84
    %157 = vmatpush1.msra.mxu0 %v83
    %158 = vmatprep.subr.mxu0 %v86
    %159 = vmatpush1.msra.mxu0 %v85
    %160 = vmatprep.subr.mxu0 %v88
    %161 = vmatpush1.msra.mxu0 %v87
    %162 = vmatprep.subr.mxu0 %v90
    %163 = vmatpush1.msra.mxu0 %v89
    %164 = vmatprep.subr.mxu0 %v92
    %165 = vmatpush1.msra.mxu0 %v91
    %166 = vmatprep.subr.mxu0 %v94
    %167 = vmatpush1.msra.mxu0 %v93
    %168 = vmatprep.subr.mxu0 %v96
    %169 = vmatpush1.msra.mxu0 %v95
    %170 = vmatprep.subr.mxu0 %v98
    %171 = vmatpush1.msra.mxu0 %v97
    %172 = vmatprep.subr.mxu0 %v100
    %173 = vmatpush1.msra.mxu0 %v99
    %174 = vmatprep.subr.mxu0 %v102
    %175 = vmatpush1.msra.mxu0 %v101
    %176 = vmatprep.subr.mxu0 %v104
    %177 = vmatpush1.msra.mxu0 %v103
    %178 = vmatprep.subr.mxu0 %v106
    %179 = vmatpush1.msra.mxu0 %v105
    %180 = vmatprep.subr.mxu0 0.0
    %181 = vmatpush1.msra.mxu0 0.0
    %182 = vmatprep.subr.mxu0 0.0
    %183 = vmatpush1.msra.mxu0 0.0
    %184 = vmatprep.subr.mxu0 0.0
    %185 = vmatpush1.msra.mxu0 0.0
    %186 = vmatprep.subr.mxu0 0.0
    %187 = vmatpush1.msra.mxu0 0.0
    %188 = vmatprep.subr.mxu0 0.0
    %189 = vmatpush1.msra.mxu0 0.0
    %190 = vmatprep.subr.mxu0 0.0
    %191 = vmatpush1.msra.mxu0 0.0
    %192 = vmatprep.subr.mxu0 0.0
    %193 = vmatpush1.msra.mxu0 0.0
    %194 = vmatprep.subr.mxu0 0.0
    %195 = vmatpush1.msra.mxu0 0.0
    %196 = vmatprep.mubr.f32.mxu0 %v121
    %197 = vmatmul.mubr.f32.gmra.mrb[0].mxu0 %v51
    %v198 = vpop.f32.mrb[0].mxu0
    %v199 = vadd.f32 %v112, %v198
    %v200 = vpop.f32.mrb[0].mxu0
    %v201 = vadd.f32 %v116, %v200
    %202 = vmatprep.mubr.f32.mxu0 %v124
    %203 = vmatmul.mubr.f32.gmra.mrb[0].mxu0 %v53
    %v204 = vpop.f32.mrb[0].mxu0
    %v205 = vadd.f32 %v112, %v204
    %v206 = vpop.f32.mrb[0].mxu0
    %v207 = vadd.f32 %v116, %v206
    %208 = vmatprep.mubr.f32.mxu0 %v127
    %209 = vmatmul.mubr.f32.gmra.mrb[0].mxu0 %v55
    %v210 = vpop.f32.mrb[0].mxu0
    %v211 = vadd.f32 %v112, %v210
    %v212 = vpop.f32.mrb[0].mxu0
    %v213 = vadd.f32 %v116, %v212
    %214 = vmatprep.mubr.f32.mxu0 %v130
    %215 = vmatmul.mubr.f32.gmra.mrb[0].mxu0 %v57
    %v216 = vpop.f32.mrb[0].mxu0
    %v217 = vadd.f32 %v112, %v216
    %v218 = vpop.f32.mrb[0].mxu0
    %v219 = vadd.f32 %v116, %v218
    %220 = vdwg.mxu0
    %v221 = vmax.f32 %v199, 0.0
    %v222 = vmax.f32 %v201, 0.0
    %v223 = vmax.f32 %v205, 0.0
    %v224 = vmax.f32 %v207, 0.0
    %v225 = vmax.f32 %v211, 0.0
    %v226 = vmax.f32 %v213, 0.0
    %v227 = vmax.f32 %v217, 0.0
    %v228 = vmax.f32 %v219, 0.0
    %v229 = vmax.f32 %v221, %v222
    %v230 = vmax.f32 %v223, %v224
    %v231 = vmax.f32 %v225, %v226
    %v232 = vmax.f32 %v227, %v228
    %v233 = vld [vmem:[%s1] sm:$0xff]
    %v234 = vld [vmem:[%s1 + $0x8] sm:$0xff]
    %vm235 = vcmask 261120
    %v237 = vsel %vm235, %v233, 0
    %v240 = vsel %vm235, %v234, 0
    %242 = vmatprep.subr.mxu0 0.0
    %243 = vmatpush1.msra.mxu0 %v229
    %244 = vmatprep.subr.mxu0 0.0
    %245 = vmatpush1.msra.mxu0 %v230
    %246 = vmatprep.subr.mxu0 0.0
    %247 = vmatpush1.msra.mxu0 %v231
    %248 = vmatprep.subr.mxu0 0.0
    %249 = vmatpush1.msra.mxu0 %v232
    %250 = vmatprep.subr.mxu0 0.0
    %251 = vmatpush1.msra.mxu0 0.0
    %252 = vmatprep.subr.mxu0 0.0
    %253 = vmatpush1.msra.mxu0 0.0
    %254 = vmatprep.subr.mxu0 0.0
    %255 = vmatpush1.msra.mxu0 0.0
    %256 = vmatprep.subr.mxu0 0.0
    %257 = vmatpush1.msra.mxu0 0.0
    %258 = vmatprep.subr.mxu0 0.0
    %259 = vmatpush1.msra.mxu0 0.0
    %260 = vmatprep.subr.mxu0 0.0
    %261 = vmatpush1.msra.mxu0 0.0
    %262 = vmatprep.subr.mxu0 0.0
    %263 = vmatpush1.msra.mxu0 0.0
    %264 = vmatprep.subr.mxu0 0.0
    %265 = vmatpush1.msra.mxu0 0.0
    %266 = vmatprep.subr.mxu0 0.0
    %267 = vmatpush1.msra.mxu0 0.0
    %268 = vmatprep.subr.mxu0 0.0
    %269 = vmatpush1.msra.mxu0 0.0
    %270 = vmatprep.subr.mxu0 0.0
    %271 = vmatpush1.msra.mxu0 0.0
    %272 = vmatprep.subr.mxu0 0.0
    %273 = vmatpush1.msra.mxu0 0.0
    %274 = vmatprep.subr.mxu0 0.0
    %275 = vmatpush1.msra.mxu0 0.0
    %276 = vmatprep.subr.mxu0 0.0
    %277 = vmatpush1.msra.mxu0 0.0
    %278 = vmatprep.subr.mxu0 0.0
    %279 = vmatpush1.msra.mxu0 0.0
    %280 = vmatprep.subr.mxu0 0.0
    %281 = vmatpush1.msra.mxu0 0.0
    %282 = vmatprep.subr.mxu0 0.0
    %283 = vmatpush1.msra.mxu0 0.0
    %284 = vmatprep.subr.mxu0 0.0
    %285 = vmatpush1.msra.mxu0 0.0
    %286 = vmatprep.subr.mxu0 0.0
    %287 = vmatpush1.msra.mxu0 0.0
    %288 = vmatprep.subr.mxu0 0.0
    %289 = vmatpush1.msra.mxu0 0.0
    %290 = vmatprep.subr.mxu0 0.0
    %291 = vmatpush1.msra.mxu0 0.0
    %292 = vmatprep.subr.mxu0 0.0
    %293 = vmatpush1.msra.mxu0 0.0
    %294 = vmatprep.subr.mxu0 0.0
    %295 = vmatpush1.msra.mxu0 0.0
    %296 = vmatprep.subr.mxu0 0.0
    %297 = vmatpush1.msra.mxu0 0.0
    %298 = vmatprep.subr.mxu0 0.0
    %299 = vmatpush1.msra.mxu0 0.0
    %300 = vmatprep.subr.mxu0 0.0
    %301 = vmatpush1.msra.mxu0 0.0
    %302 = vmatprep.subr.mxu0 0.0
    %303 = vmatpush1.msra.mxu0 0.0
    %304 = vmatprep.subr.mxu0 0.0
    %305 = vmatpush1.msra.mxu0 0.0
    %306 = vmatprep.mubr.f32.mxu0 0.0
    %307 = vmatmul.mubr.f32.gmra.mrb[0].mxu0 %v237
    %v308 = vpop.f32.mrb[0].mxu0
    %v309 = vadd.f32 0.0, %v308
    %v310 = vpop.f32.mrb[0].mxu0
    %311 = vmatprep.mubr.f32.mxu0 0.0
    %312 = vmatmul.mubr.f32.gmra.mrb[0].mxu0 %v240
    %v313 = vpop.f32.mrb[0].mxu0
    %v314 = vadd.f32 0.0, %v313
    %v315 = vpop.f32.mrb[0].mxu0
    %316 = vdwg.mxu0
    %v317 = vld [vmem:[%s2] sm:$0xff]
    %v318 = vld [vmem:[%s2 + $0x8] sm:$0xff]
    %v320 = vsel %vm235, %v317, 0
    %v323 = vsel %vm235, %v318, 0
    %325 = vmatprep.subr.mxu0 0.0
    %326 = vmatpush1.msra.mxu0 %v229
    %327 = vmatprep.subr.mxu0 0.0
    %328 = vmatpush1.msra.mxu0 %v230
    %329 = vmatprep.subr.mxu0 0.0
    %330 = vmatpush1.msra.mxu0 %v231
    %331 = vmatprep.subr.mxu0 0.0
    %332 = vmatpush1.msra.mxu0 %v232
    %333 = vmatprep.subr.mxu0 0.0
    %334 = vmatpush1.msra.mxu0 0.0
    %335 = vmatprep.subr.mxu0 0.0
    %336 = vmatpush1.msra.mxu0 0.0
    %337 = vmatprep.subr.mxu0 0.0
    %338 = vmatpush1.msra.mxu0 0.0
    %339 = vmatprep.subr.mxu0 0.0
    %340 = vmatpush1.msra.mxu0 0.0
    %341 = vmatprep.subr.mxu0 0.0
    %342 = vmatpush1.msra.mxu0 0.0
    %343 = vmatprep.subr.mxu0 0.0
    %344 = vmatpush1.msra.mxu0 0.0
    %345 = vmatprep.subr.mxu0 0.0
    %346 = vmatpush1.msra.mxu0 0.0
    %347 = vmatprep.subr.mxu0 0.0
    %348 = vmatpush1.msra.mxu0 0.0
    %349 = vmatprep.subr.mxu0 0.0
    %350 = vmatpush1.msra.mxu0 0.0
    %351 = vmatprep.subr.mxu0 0.0
    %352 = vmatpush1.msra.mxu0 0.0
    %353 = vmatprep.subr.mxu0 0.0
    %354 = vmatpush1.msra.mxu0 0.0
    %355 = vmatprep.subr.mxu0 0.0
    %356 = vmatpush1.msra.mxu0 0.0
    %357 = vmatprep.subr.mxu0 0.0
    %358 = vmatpush1.msra.mxu0 0.0
    %359 = vmatprep.subr.mxu0 0.0
    %360 = vmatpush1.msra.mxu0 0.0
    %361 = vmatprep.subr.mxu0 0.0
    %362 = vmatpush1.msra.mxu0 0.0
    %363 = vmatprep.subr.mxu0 0.0
    %364 = vmatpush1.msra.mxu0 0.0
    %365 = vmatprep.subr.mxu0 0.0
    %366 = vmatpush1.msra.mxu0 0.0
    %367 = vmatprep.subr.mxu0 0.0
    %368 = vmatpush1.msra.mxu0 0.0
    %369 = vmatprep.subr.mxu0 0.0
    %370 = vmatpush1.msra.mxu0 0.0
    %371 = vmatprep.subr.mxu0 0.0
    %372 = vmatpush1.msra.mxu0 0.0
    %373 = vmatprep.subr.mxu0 0.0
    %374 = vmatpush1.msra.mxu0 0.0
    %375 = vmatprep.subr.mxu0 0.0
    %376 = vmatpush1.msra.mxu0 0.0
    %377 = vmatprep.subr.mxu0 0.0
    %378 = vmatpush1.msra.mxu0 0.0
    %379 = vmatprep.subr.mxu0 0.0
    %380 = vmatpush1.msra.mxu0 0.0
    %381 = vmatprep.subr.mxu0 0.0
    %382 = vmatpush1.msra.mxu0 0.0
    %383 = vmatprep.subr.mxu0 0.0
    %384 = vmatpush1.msra.mxu0 0.0
    %385 = vmatprep.subr.mxu0 0.0
    %386 = vmatpush1.msra.mxu0 0.0
    %387 = vmatprep.subr.mxu0 0.0
    %388 = vmatpush1.msra.mxu0 0.0
    %389 = vmatprep.mubr.f32.mxu0 0.0
    %390 = vmatmul.mubr.f32.gmra.mrb[0].mxu0 %v320
    %v391 = vpop.f32.mrb[0].mxu0
    %v392 = vadd.f32 0.0, %v391
    %v393 = vpop.f32.mrb[0].mxu0
    %394 = vmatprep.mubr.f32.mxu0 0.0
    %395 = vmatmul.mubr.f32.gmra.mrb[0].mxu0 %v323
    %v396 = vpop.f32.mrb[0].mxu0
    %v397 = vadd.f32 0.0, %v396
    %v398 = vpop.f32.mrb[0].mxu0
    %399 = vdwg.mxu0
    %v400 = vmax.f32 %v309, %v392
    %v401 = vmax.f32 %v314, %v397
    %402 = vst [vmem:[#allocation2] sm:$0xff] %v400
    %403 = vst [vmem:[#allocation2 + $0x8] sm:$0xff] %v401
    %v404 = vld [vmem:[#allocation2] sm:$0xff]
    %v405 = vld [vmem:[#allocation2 + $0x8] sm:$0x3f]
    %v406 = vld [vmem:[%s7] sm:$0xff]
    %v407 = vld [vmem:[%s7 + $0x8] sm:$0xff]
    %v408 = vld [vmem:[%s7 + $0x10] sm:$0xff]
    %v409 = vld [vmem:[%s7 + $0x18] sm:$0xff]
    %v410 = vld [vmem:[%s7 + $0x20] sm:$0xff]
    %v411 = vld [vmem:[%s7 + $0x28] sm:$0xff]
    %v412 = vld [vmem:[%s7 + $0x30] sm:$0xff]
    %v413 = vld [vmem:[%s7 + $0x38] sm:$0xff]
    %v414 = vld [vmem:[%s7 + $0x40] sm:$0xff]
    %v415 = vld [vmem:[%s7 + $0x48] sm:$0xff]
    %v416 = vld [vmem:[%s7 + $0x50] sm:$0xff]
    %v417 = vld [vmem:[%s7 + $0x58] sm:$0xff]
    %v418 = vld [vmem:[%s7 + $0x60] sm:$0xff]
    %v419 = vld [vmem:[%s7 + $0x68] sm:$0xff]
    %v420 = vld [vmem:[%s7 + $0x70] sm:$0xff]
    %v421 = vld [vmem:[%s7 + $0x78] sm:$0xff]
    %v422 = vld [vmem:[%s7 + $0x80] sm:$0xff]
    %v423 = vld [vmem:[%s7 + $0x88] sm:$0xff]
    %v424 = vld [vmem:[%s7 + $0x90] sm:$0xff]
    %v425 = vld [vmem:[%s7 + $0x98] sm:$0xff]
    %v426 = vld [vmem:[%s7 + $0xa0] sm:$0xff]
    %v427 = vld [vmem:[%s7 + $0xa8] sm:$0xff]
    %v428 = vld [vmem:[%s7 + $0xb0] sm:$0xff]
    %v429 = vld [vmem:[%s7 + $0xb8] sm:$0xff]
    %v430 = vld [vmem:[%s7 + $0xc0] sm:$0xff]
    %v431 = vld [vmem:[%s7 + $0xc8] sm:$0xff]
    %v432 = vld [vmem:[%s7 + $0xd0] sm:$0xff]
    %v433 = vld [vmem:[%s7 + $0xd8] sm:$0xff]
    %v434 = vld [vmem:[%s7 + $0xe0] sm:$0xff]
    %v435 = vld [vmem:[%s7 + $0xe8] sm:$0xff]
    %v436 = vld [vmem:[%s7 + $0xf0] sm:$0xff]
    %v437 = vld [vmem:[%s7 + $0xf8] sm:$0xff]
    %v438 = vld [vmem:[#allocation2 + $0x1] sm:$0xff]
    %v439 = vld [vmem:[#allocation2 + $0x9] sm:$0x3f]
    %s440 = scalar_lea.vmem %s7, 256
    %v441 = vld [vmem:[%s440] sm:$0xff]
    %v442 = vld [vmem:[%s440 + $0x8] sm:$0xff]
    %v443 = vld [vmem:[%s440 + $0x10] sm:$0xff]
    %v444 = vld [vmem:[%s440 + $0x18] sm:$0xff]
    %v445 = vld [vmem:[%s440 + $0x20] sm:$0xff]
    %v446 = vld [vmem:[%s440 + $0x28] sm:$0xff]
    %v447 = vld [vmem:[%s440 + $0x30] sm:$0xff]
    %v448 = vld [vmem:[%s440 + $0x38] sm:$0xff]
    %v449 = vld [vmem:[%s440 + $0x40] sm:$0xff]
    %v450 = vld [vmem:[%s440 + $0x48] sm:$0xff]
    %v451 = vld [vmem:[%s440 + $0x50] sm:$0xff]
    %v452 = vld [vmem:[%s440 + $0x58] sm:$0xff]
    %v453 = vld [vmem:[%s440 + $0x60] sm:$0xff]
    %v454 = vld [vmem:[%s440 + $0x68] sm:$0xff]
    %v455 = vld [vmem:[%s440 + $0x70] sm:$0xff]
    %v456 = vld [vmem:[%s440 + $0x78] sm:$0xff]
    %v457 = vld [vmem:[%s440 + $0x80] sm:$0xff]
    %v458 = vld [vmem:[%s440 + $0x88] sm:$0xff]
    %v459 = vld [vmem:[%s440 + $0x90] sm:$0xff]
    %v460 = vld [vmem:[%s440 + $0x98] sm:$0xff]
    %v461 = vld [vmem:[%s440 + $0xa0] sm:$0xff]
    %v462 = vld [vmem:[%s440 + $0xa8] sm:$0xff]
    %v463 = vld [vmem:[%s440 + $0xb0] sm:$0xff]
    %v464 = vld [vmem:[%s440 + $0xb8] sm:$0xff]
    %v465 = vld [vmem:[%s440 + $0xc0] sm:$0xff]
    %v466 = vld [vmem:[%s440 + $0xc8] sm:$0xff]
    %v467 = vld [vmem:[%s440 + $0xd0] sm:$0xff]
    %v468 = vld [vmem:[%s440 + $0xd8] sm:$0xff]
    %v469 = vld [vmem:[%s440 + $0xe0] sm:$0xff]
    %v470 = vld [vmem:[%s440 + $0xe8] sm:$0xff]
    %v471 = vld [vmem:[%s440 + $0xf0] sm:$0xff]
    %v472 = vld [vmem:[%s440 + $0xf8] sm:$0xff]
    %473 = vmatprep.subr.mxu0 %v442
    %474 = vmatpush1.msra.mxu0 %v441
    %475 = vmatprep.subr.mxu0 %v444
    %476 = vmatpush1.msra.mxu0 %v443
    %477 = vmatprep.subr.mxu0 %v446
    %478 = vmatpush1.msra.mxu0 %v445
    %479 = vmatprep.subr.mxu0 %v448
    %480 = vmatpush1.msra.mxu0 %v447
    %481 = vmatprep.subr.mxu0 %v450
    %482 = vmatpush1.msra.mxu0 %v449
    %483 = vmatprep.subr.mxu0 %v452
    %484 = vmatpush1.msra.mxu0 %v451
    %485 = vmatprep.subr.mxu0 %v454
    %486 = vmatpush1.msra.mxu0 %v453
    %487 = vmatprep.subr.mxu0 %v456
    %488 = vmatpush1.msra.mxu0 %v455
    %489 = vmatprep.subr.mxu0 %v458
    %490 = vmatpush1.msra.mxu0 %v457
    %491 = vmatprep.subr.mxu0 %v460
    %492 = vmatpush1.msra.mxu0 %v459
    %493 = vmatprep.subr.mxu0 %v462
    %494 = vmatpush1.msra.mxu0 %v461
    %495 = vmatprep.subr.mxu0 %v464
    %496 = vmatpush1.msra.mxu0 %v463
    %497 = vmatprep.subr.mxu0 %v466
    %498 = vmatpush1.msra.mxu0 %v465
    %499 = vmatprep.subr.mxu0 %v468
    %500 = vmatpush1.msra.mxu0 %v467
    %501 = vmatprep.subr.mxu0 %v470
    %502 = vmatpush1.msra.mxu0 %v469
    %503 = vmatprep.subr.mxu0 %v472
    %504 = vmatpush1.msra.mxu0 %v471
    %505 = vmatprep.subr.mxu0 0.0
    %506 = vmatpush1.msra.mxu0 0.0
    %507 = vmatprep.subr.mxu0 0.0
    %508 = vmatpush1.msra.mxu0 0.0
    %509 = vmatprep.subr.mxu0 0.0
    %510 = vmatpush1.msra.mxu0 0.0
    %511 = vmatprep.subr.mxu0 0.0
    %512 = vmatpush1.msra.mxu0 0.0
    %513 = vmatprep.subr.mxu0 0.0
    %514 = vmatpush1.msra.mxu0 0.0
    %515 = vmatprep.subr.mxu0 0.0
    %516 = vmatpush1.msra.mxu0 0.0
    %517 = vmatprep.subr.mxu0 0.0
    %518 = vmatpush1.msra.mxu0 0.0
    %519 = vmatprep.subr.mxu0 0.0
    %520 = vmatpush1.msra.mxu0 0.0
    %521 = vmatprep.subr.mxu0 0.0
    %522 = vmatpush1.msra.mxu0 0.0
    %523 = vmatprep.subr.mxu0 0.0
    %524 = vmatpush1.msra.mxu0 0.0
    %525 = vmatprep.subr.mxu0 0.0
    %526 = vmatpush1.msra.mxu0 0.0
    %527 = vmatprep.subr.mxu0 0.0
    %528 = vmatpush1.msra.mxu0 0.0
    %529 = vmatprep.subr.mxu0 0.0
    %530 = vmatpush1.msra.mxu0 0.0
    %531 = vmatprep.subr.mxu0 0.0
    %532 = vmatpush1.msra.mxu0 0.0
    %533 = vmatprep.subr.mxu0 0.0
    %534 = vmatpush1.msra.mxu0 0.0
    %535 = vmatprep.subr.mxu0 0.0
    %536 = vmatpush1.msra.mxu0 0.0
    %537 = vmatprep.mubr.f32.mxu0 0.0
    %538 = vmatmul.mubr.f32.gmra.mrb[0].mxu0 %v438
    %v539 = vpop.f32.mrb[0].mxu0
    %v540 = vadd.f32 0.0, %v539
    %v541 = vpop.f32.mrb[0].mxu0
    %v542 = vadd.f32 0.0, %v541
    %543 = vmatprep.mubr.f32.mxu0 0.0
    %544 = vmatmul.mubr.f32.gmra.mrb[0].mxu0 %v439
    %v545 = vpop.f32.mrb[0].mxu0
    %v546 = vadd.f32 0.0, %v545
    %v547 = vpop.f32.mrb[0].mxu0
    %v548 = vadd.f32 0.0, %v547
    %549 = vdwg.mxu0
    %550 = vmatprep.subr.mxu0 %v407
    %551 = vmatpush1.msra.mxu0 %v406
    %552 = vmatprep.subr.mxu0 %v409
    %553 = vmatpush1.msra.mxu0 %v408
    %554 = vmatprep.subr.mxu0 %v411
    %555 = vmatpush1.msra.mxu0 %v410
    %556 = vmatprep.subr.mxu0 %v413
    %557 = vmatpush1.msra.mxu0 %v412
    %558 = vmatprep.subr.mxu0 %v415
    %559 = vmatpush1.msra.mxu0 %v414
    %560 = vmatprep.subr.mxu0 %v417
    %561 = vmatpush1.msra.mxu0 %v416
    %562 = vmatprep.subr.mxu0 %v419
    %563 = vmatpush1.msra.mxu0 %v418
    %564 = vmatprep.subr.mxu0 %v421
    %565 = vmatpush1.msra.mxu0 %v420
    %566 = vmatprep.subr.mxu0 %v423
    %567 = vmatpush1.msra.mxu0 %v422
    %568 = vmatprep.subr.mxu0 %v425
    %569 = vmatpush1.msra.mxu0 %v424
    %570 = vmatprep.subr.mxu0 %v427
    %571 = vmatpush1.msra.mxu0 %v426
    %572 = vmatprep.subr.mxu0 %v429
    %573 = vmatpush1.msra.mxu0 %v428
    %574 = vmatprep.subr.mxu0 %v431
    %575 = vmatpush1.msra.mxu0 %v430
    %576 = vmatprep.subr.mxu0 %v433
    %577 = vmatpush1.msra.mxu0 %v432
    %578 = vmatprep.subr.mxu0 %v435
    %579 = vmatpush1.msra.mxu0 %v434
    %580 = vmatprep.subr.mxu0 %v437
    %581 = vmatpush1.msra.mxu0 %v436
    %582 = vmatprep.subr.mxu0 0.0
    %583 = vmatpush1.msra.mxu0 0.0
    %584 = vmatprep.subr.mxu0 0.0
    %585 = vmatpush1.msra.mxu0 0.0
    %586 = vmatprep.subr.mxu0 0.0
    %587 = vmatpush1.msra.mxu0 0.0
    %588 = vmatprep.subr.mxu0 0.0
    %589 = vmatpush1.msra.mxu0 0.0
    %590 = vmatprep.subr.mxu0 0.0
    %591 = vmatpush1.msra.mxu0 0.0
    %592 = vmatprep.subr.mxu0 0.0
    %593 = vmatpush1.msra.mxu0 0.0
    %594 = vmatprep.subr.mxu0 0.0
    %595 = vmatpush1.msra.mxu0 0.0
    %596 = vmatprep.subr.mxu0 0.0
    %597 = vmatpush1.msra.mxu0 0.0
    %598 = vmatprep.subr.mxu0 0.0
    %599 = vmatpush1.msra.mxu0 0.0
    %600 = vmatprep.subr.mxu0 0.0
    %601 = vmatpush1.msra.mxu0 0.0
    %602 = vmatprep.subr.mxu0 0.0
    %603 = vmatpush1.msra.mxu0 0.0
    %604 = vmatprep.subr.mxu0 0.0
    %605 = vmatpush1.msra.mxu0 0.0
    %606 = vmatprep.subr.mxu0 0.0
    %607 = vmatpush1.msra.mxu0 0.0
    %608 = vmatprep.subr.mxu0 0.0
    %609 = vmatpush1.msra.mxu0 0.0
    %610 = vmatprep.subr.mxu0 0.0
    %611 = vmatpush1.msra.mxu0 0.0
    %612 = vmatprep.subr.mxu0 0.0
    %613 = vmatpush1.msra.mxu0 0.0
    %614 = vmatprep.mubr.f32.mxu0 0.0
    %615 = vmatmul.mubr.f32.gmra.mrb[0].mxu0 %v404
    %v616 = vpop.f32.mrb[0].mxu0
    %v617 = vadd.f32 %v540, %v616
    %v618 = vpop.f32.mrb[0].mxu0
    %v619 = vadd.f32 %v542, %v618
    %620 = vmatprep.mubr.f32.mxu0 0.0
    %621 = vmatmul.mubr.f32.gmra.mrb[0].mxu0 %v405
    %v622 = vpop.f32.mrb[0].mxu0
    %v623 = vadd.f32 %v546, %v622
    %v624 = vpop.f32.mrb[0].mxu0
    %v625 = vadd.f32 %v548, %v624
    %626 = vdwg.mxu0
    %v627 = vld [vmem:[#allocation2 + $0x2] sm:$0xff]
    %v628 = vld [vmem:[#allocation2 + $0xa] sm:$0x3f]
    %s629 = scalar_lea.vmem %s7, 512
    %v630 = vld [vmem:[%s629] sm:$0xff]
    %v631 = vld [vmem:[%s629 + $0x8] sm:$0xff]
    %v632 = vld [vmem:[%s629 + $0x10] sm:$0xff]
    %v633 = vld [vmem:[%s629 + $0x18] sm:$0xff]
    %v634 = vld [vmem:[%s629 + $0x20] sm:$0xff]
    %v635 = vld [vmem:[%s629 + $0x28] sm:$0xff]
    %v636 = vld [vmem:[%s629 + $0x30] sm:$0xff]
    %v637 = vld [vmem:[%s629 + $0x38] sm:$0xff]
    %v638 = vld [vmem:[%s629 + $0x40] sm:$0xff]
    %v639 = vld [vmem:[%s629 + $0x48] sm:$0xff]
    %v640 = vld [vmem:[%s629 + $0x50] sm:$0xff]
    %v641 = vld [vmem:[%s629 + $0x58] sm:$0xff]
    %v642 = vld [vmem:[%s629 + $0x60] sm:$0xff]
    %v643 = vld [vmem:[%s629 + $0x68] sm:$0xff]
    %v644 = vld [vmem:[%s629 + $0x70] sm:$0xff]
    %v645 = vld [vmem:[%s629 + $0x78] sm:$0xff]
    %v646 = vld [vmem:[%s629 + $0x80] sm:$0xff]
    %v647 = vld [vmem:[%s629 + $0x88] sm:$0xff]
    %v648 = vld [vmem:[%s629 + $0x90] sm:$0xff]
    %v649 = vld [vmem:[%s629 + $0x98] sm:$0xff]
    %v650 = vld [vmem:[%s629 + $0xa0] sm:$0xff]
    %v651 = vld [vmem:[%s629 + $0xa8] sm:$0xff]
    %v652 = vld [vmem:[%s629 + $0xb0] sm:$0xff]
    %v653 = vld [vmem:[%s629 + $0xb8] sm:$0xff]
    %v654 = vld [vmem:[%s629 + $0xc0] sm:$0xff]
    %v655 = vld [vmem:[%s629 + $0xc8] sm:$0xff]
    %v656 = vld [vmem:[%s629 + $0xd0] sm:$0xff]
    %v657 = vld [vmem:[%s629 + $0xd8] sm:$0xff]
    %v658 = vld [vmem:[%s629 + $0xe0] sm:$0xff]
    %v659 = vld [vmem:[%s629 + $0xe8] sm:$0xff]
    %v660 = vld [vmem:[%s629 + $0xf0] sm:$0xff]
    %v661 = vld [vmem:[%s629 + $0xf8] sm:$0xff]
    %662 = vmatprep.subr.mxu0 %v631
    %663 = vmatpush1.msra.mxu0 %v630
    %664 = vmatprep.subr.mxu0 %v633
    %665 = vmatpush1.msra.mxu0 %v632
    %666 = vmatprep.subr.mxu0 %v635
    %667 = vmatpush1.msra.mxu0 %v634
    %668 = vmatprep.subr.mxu0 %v637
    %669 = vmatpush1.msra.mxu0 %v636
    %670 = vmatprep.subr.mxu0 %v639
    %671 = vmatpush1.msra.mxu0 %v638
    %672 = vmatprep.subr.mxu0 %v641
    %673 = vmatpush1.msra.mxu0 %v640
    %674 = vmatprep.subr.mxu0 %v643
    %675 = vmatpush1.msra.mxu0 %v642
    %676 = vmatprep.subr.mxu0 %v645
    %677 = vmatpush1.msra.mxu0 %v644
    %678 = vmatprep.subr.mxu0 %v647
    %679 = vmatpush1.msra.mxu0 %v646
    %680 = vmatprep.subr.mxu0 %v649
    %681 = vmatpush1.msra.mxu0 %v648
    %682 = vmatprep.subr.mxu0 %v651
    %683 = vmatpush1.msra.mxu0 %v650
    %684 = vmatprep.subr.mxu0 %v653
    %685 = vmatpush1.msra.mxu0 %v652
    %686 = vmatprep.subr.mxu0 %v655
    %687 = vmatpush1.msra.mxu0 %v654
    %688 = vmatprep.subr.mxu0 %v657
    %689 = vmatpush1.msra.mxu0 %v656
    %690 = vmatprep.subr.mxu0 %v659
    %691 = vmatpush1.msra.mxu0 %v658
    %692 = vmatprep.subr.mxu0 %v661
    %693 = vmatpush1.msra.mxu0 %v660
    %694 = vmatprep.subr.mxu0 0.0
    %695 = vmatpush1.msra.mxu0 0.0
    %696 = vmatprep.subr.mxu0 0.0
    %697 = vmatpush1.msra.mxu0 0.0
    %698 = vmatprep.subr.mxu0 0.0
    %699 = vmatpush1.msra.mxu0 0.0
    %700 = vmatprep.subr.mxu0 0.0
    %701 = vmatpush1.msra.mxu0 0.0
    %702 = vmatprep.subr.mxu0 0.0
    %703 = vmatpush1.msra.mxu0 0.0
    %704 = vmatprep.subr.mxu0 0.0
    %705 = vmatpush1.msra.mxu0 0.0
    %706 = vmatprep.subr.mxu0 0.0
    %707 = vmatpush1.msra.mxu0 0.0
    %708 = vmatprep.subr.mxu0 0.0
    %709 = vmatpush1.msra.mxu0 0.0
    %710 = vmatprep.subr.mxu0 0.0
    %711 = vmatpush1.msra.mxu0 0.0
    %712 = vmatprep.subr.mxu0 0.0
    %713 = vmatpush1.msra.mxu0 0.0
    %714 = vmatprep.subr.mxu0 0.0
    %715 = vmatpush1.msra.mxu0 0.0
    %716 = vmatprep.subr.mxu0 0.0
    %717 = vmatpush1.msra.mxu0 0.0
    %718 = vmatprep.subr.mxu0 0.0
    %719 = vmatpush1.msra.mxu0 0.0
    %720 = vmatprep.subr.mxu0 0.0
    %721 = vmatpush1.msra.mxu0 0.0
    %722 = vmatprep.subr.mxu0 0.0
    %723 = vmatpush1.msra.mxu0 0.0
    %724 = vmatprep.subr.mxu0 0.0
    %725 = vmatpush1.msra.mxu0 0.0
    %726 = vmatprep.mubr.f32.mxu0 0.0
    %727 = vmatmul.mubr.f32.gmra.mrb[0].mxu0 %v627
    %v728 = vpop.f32.mrb[0].mxu0
    %v729 = vadd.f32 0.0, %v728
    %v730 = vpop.f32.mrb[0].mxu0
    %v731 = vadd.f32 0.0, %v730
    %732 = vmatprep.mubr.f32.mxu0 0.0
    %733 = vmatmul.mubr.f32.gmra.mrb[0].mxu0 %v628
    %v734 = vpop.f32.mrb[0].mxu0
    %v735 = vadd.f32 0.0, %v734
    %v736 = vpop.f32.mrb[0].mxu0
    %v737 = vadd.f32 0.0, %v736
    %738 = vdwg.mxu0
    %v739 = vadd.f32 %v617, %v729
    %v740 = vadd.f32 %v619, %v731
    %v741 = vadd.f32 %v623, %v735
    %v742 = vadd.f32 %v625, %v737
    %v743 = vld [vmem:[%s8] sm:$0x3]
    %v745 = vlaneseq
    %v746 = vshrl.u32 %v745, 7
    %v747 = vsub.s32 0, %v746
    %v748 = vrot.slane %v743, %v747
    %v749 = vlaneseq
    %v750 = vshrl.u32 %v749, 7
    %v751 = vsub.s32 1, %v750
    %v752 = vrot.slane %v743, %v751
    %v755 = vadd.f32 %v739, %v748
    %v756 = vadd.f32 %v740, %v752
    %v757 = vadd.f32 %v741, %v748
    %v758 = vadd.f32 %v742, %v752
    %v759 = vmax.f32 %v755, 0.0
    %v760 = vmax.f32 %v756, 0.0
    %v761 = vmax.f32 %v757, 0.0
    %v762 = vmax.f32 %v758, 0.0
    %763 = vst [vmem:[#allocation3] sm:$0xff] %v759
    %764 = vst [vmem:[#allocation3 + $0x8] sm:$0xff] %v760
    %765 = vst [vmem:[#allocation3 + $0x10] sm:$0x3f] %v761
    %766 = vst [vmem:[#allocation3 + $0x18] sm:$0x3f] %v762
    %767 = vst [vmem:[#allocation3 + $0x10] sm:$0xc0] 0.0
    %768 = vst [vmem:[#allocation3 + $0x18] sm:$0xc0] 0.0
    %v769 = vld [vmem:[#allocation3] sm:$0xff]
    %v770 = vld [vmem:[#allocation3 + $0x8] sm:$0xff]
    %v771 = vld [vmem:[#allocation3 + $0x10] sm:$0xff]
    %v772 = vld [vmem:[#allocation3 + $0x18] sm:$0xff]
    %v773 = vmax.f32 %v769, %v770
    %v774 = vmax.f32 %v771, %v772
    %v775 = vld [vmem:[%s3] sm:$0xff]
    %vm776 = vcmask 130048
    %v778 = vsel %vm776, %v775, 0
    %780 = vmatprep.subr.mxu0 0.0
    %781 = vmatpush1.msra.mxu0 %v773
    %782 = vmatprep.subr.mxu0 0.0
    %783 = vmatpush1.msra.mxu0 %v774
    %784 = vmatprep.subr.mxu0 0.0
    %785 = vmatpush1.msra.mxu0 0.0
    %786 = vmatprep.subr.mxu0 0.0
    %787 = vmatpush1.msra.mxu0 0.0
    %788 = vmatprep.subr.mxu0 0.0
    %789 = vmatpush1.msra.mxu0 0.0
    %790 = vmatprep.subr.mxu0 0.0
    %791 = vmatpush1.msra.mxu0 0.0
    %792 = vmatprep.subr.mxu0 0.0
    %793 = vmatpush1.msra.mxu0 0.0
    %794 = vmatprep.subr.mxu0 0.0
    %795 = vmatpush1.msra.mxu0 0.0
    %796 = vmatprep.subr.mxu0 0.0
    %797 = vmatpush1.msra.mxu0 0.0
    %798 = vmatprep.subr.mxu0 0.0
    %799 = vmatpush1.msra.mxu0 0.0
    %800 = vmatprep.subr.mxu0 0.0
    %801 = vmatpush1.msra.mxu0 0.0
    %802 = vmatprep.subr.mxu0 0.0
    %803 = vmatpush1.msra.mxu0 0.0
    %804 = vmatprep.subr.mxu0 0.0
    %805 = vmatpush1.msra.mxu0 0.0
    %806 = vmatprep.subr.mxu0 0.0
    %807 = vmatpush1.msra.mxu0 0.0
    %808 = vmatprep.subr.mxu0 0.0
    %809 = vmatpush1.msra.mxu0 0.0
    %810 = vmatprep.subr.mxu0 0.0
    %811 = vmatpush1.msra.mxu0 0.0
    %812 = vmatprep.subr.mxu0 0.0
    %813 = vmatpush1.msra.mxu0 0.0
    %814 = vmatprep.subr.mxu0 0.0
    %815 = vmatpush1.msra.mxu0 0.0
    %816 = vmatprep.subr.mxu0 0.0
    %817 = vmatpush1.msra.mxu0 0.0
    %818 = vmatprep.subr.mxu0 0.0
    %819 = vmatpush1.msra.mxu0 0.0
    %820 = vmatprep.subr.mxu0 0.0
    %821 = vmatpush1.msra.mxu0 0.0
    %822 = vmatprep.subr.mxu0 0.0
    %823 = vmatpush1.msra.mxu0 0.0
    %824 = vmatprep.subr.mxu0 0.0
    %825 = vmatpush1.msra.mxu0 0.0
    %826 = vmatprep.subr.mxu0 0.0
    %827 = vmatpush1.msra.mxu0 0.0
    %828 = vmatprep.subr.mxu0 0.0
    %829 = vmatpush1.msra.mxu0 0.0
    %830 = vmatprep.subr.mxu0 0.0
    %831 = vmatpush1.msra.mxu0 0.0
    %832 = vmatprep.subr.mxu0 0.0
    %833 = vmatpush1.msra.mxu0 0.0
    %834 = vmatprep.subr.mxu0 0.0
    %835 = vmatpush1.msra.mxu0 0.0
    %836 = vmatprep.subr.mxu0 0.0
    %837 = vmatpush1.msra.mxu0 0.0
    %838 = vmatprep.subr.mxu0 0.0
    %839 = vmatpush1.msra.mxu0 0.0
    %840 = vmatprep.subr.mxu0 0.0
    %841 = vmatpush1.msra.mxu0 0.0
    %842 = vmatprep.subr.mxu0 0.0
    %843 = vmatpush1.msra.mxu0 0.0
    %844 = vmatprep.mubr.f32.mxu0 0.0
    %845 = vmatmul.mubr.f32.gmra.mrb[0].mxu0 %v778
    %v846 = vpop.f32.mrb[0].mxu0
    %v847 = vadd.f32 0.0, %v846
    %v848 = vpop.f32.mrb[0].mxu0
    %849 = vdwg.mxu0
    %v850 = vld [vmem:[%s4] sm:$0xff]
    %v852 = vsel %vm776, %v850, 0
    %854 = vmatprep.subr.mxu0 0.0
    %855 = vmatpush1.msra.mxu0 %v773
    %856 = vmatprep.subr.mxu0 0.0
    %857 = vmatpush1.msra.mxu0 %v774
    %858 = vmatprep.subr.mxu0 0.0
    %859 = vmatpush1.msra.mxu0 0.0
    %860 = vmatprep.subr.mxu0 0.0
    %861 = vmatpush1.msra.mxu0 0.0
    %862 = vmatprep.subr.mxu0 0.0
    %863 = vmatpush1.msra.mxu0 0.0
    %864 = vmatprep.subr.mxu0 0.0
    %865 = vmatpush1.msra.mxu0 0.0
    %866 = vmatprep.subr.mxu0 0.0
    %867 = vmatpush1.msra.mxu0 0.0
    %868 = vmatprep.subr.mxu0 0.0
    %869 = vmatpush1.msra.mxu0 0.0
    %870 = vmatprep.subr.mxu0 0.0
    %871 = vmatpush1.msra.mxu0 0.0
    %872 = vmatprep.subr.mxu0 0.0
    %873 = vmatpush1.msra.mxu0 0.0
    %874 = vmatprep.subr.mxu0 0.0
    %875 = vmatpush1.msra.mxu0 0.0
    %876 = vmatprep.subr.mxu0 0.0
    %877 = vmatpush1.msra.mxu0 0.0
    %878 = vmatprep.subr.mxu0 0.0
    %879 = vmatpush1.msra.mxu0 0.0
    %880 = vmatprep.subr.mxu0 0.0
    %881 = vmatpush1.msra.mxu0 0.0
    %882 = vmatprep.subr.mxu0 0.0
    %883 = vmatpush1.msra.mxu0 0.0
    %884 = vmatprep.subr.mxu0 0.0
    %885 = vmatpush1.msra.mxu0 0.0
    %886 = vmatprep.subr.mxu0 0.0
    %887 = vmatpush1.msra.mxu0 0.0
    %888 = vmatprep.subr.mxu0 0.0
    %889 = vmatpush1.msra.mxu0 0.0
    %890 = vmatprep.subr.mxu0 0.0
    %891 = vmatpush1.msra.mxu0 0.0
    %892 = vmatprep.subr.mxu0 0.0
    %893 = vmatpush1.msra.mxu0 0.0
    %894 = vmatprep.subr.mxu0 0.0
    %895 = vmatpush1.msra.mxu0 0.0
    %896 = vmatprep.subr.mxu0 0.0
    %897 = vmatpush1.msra.mxu0 0.0
    %898 = vmatprep.subr.mxu0 0.0
    %899 = vmatpush1.msra.mxu0 0.0
    %900 = vmatprep.subr.mxu0 0.0
    %901 = vmatpush1.msra.mxu0 0.0
    %902 = vmatprep.subr.mxu0 0.0
    %903 = vmatpush1.msra.mxu0 0.0
    %904 = vmatprep.subr.mxu0 0.0
    %905 = vmatpush1.msra.mxu0 0.0
    %906 = vmatprep.subr.mxu0 0.0
    %907 = vmatpush1.msra.mxu0 0.0
    %908 = vmatprep.subr.mxu0 0.0
    %909 = vmatpush1.msra.mxu0 0.0
    %910 = vmatprep.subr.mxu0 0.0
    %911 = vmatpush1.msra.mxu0 0.0
    %912 = vmatprep.subr.mxu0 0.0
    %913 = vmatpush1.msra.mxu0 0.0
    %914 = vmatprep.subr.mxu0 0.0
    %915 = vmatpush1.msra.mxu0 0.0
    %916 = vmatprep.subr.mxu0 0.0
    %917 = vmatpush1.msra.mxu0 0.0
    %918 = vmatprep.mubr.f32.mxu0 0.0
    %919 = vmatmul.mubr.f32.gmra.mrb[0].mxu0 %v852
    %v920 = vpop.f32.mrb[0].mxu0
    %v921 = vadd.f32 0.0, %v920
    %v922 = vpop.f32.mrb[0].mxu0
    %923 = vdwg.mxu0
    %v924 = vmax.f32 %v847, %v921
    %925 = vst [vmem:[#allocation4] sm:$0xff] %v924
    %v926 = vld [vmem:[#allocation4] sm:$0x3]
    %v927 = vld [vmem:[%s9] sm:$0xff]
    %v928 = vld [vmem:[%s9 + $0x8] sm:$0xff]
    %v929 = vld [vmem:[%s9 + $0x10] sm:$0xff]
    %v930 = vld [vmem:[%s9 + $0x18] sm:$0xff]
    %v931 = vld [vmem:[%s9 + $0x20] sm:$0xff]
    %v932 = vld [vmem:[%s9 + $0x28] sm:$0xff]
    %v933 = vld [vmem:[%s9 + $0x30] sm:$0xff]
    %v934 = vld [vmem:[%s9 + $0x38] sm:$0xff]
    %v935 = vld [vmem:[%s9 + $0x40] sm:$0xff]
    %v936 = vld [vmem:[%s9 + $0x48] sm:$0xff]
    %v937 = vld [vmem:[%s9 + $0x50] sm:$0xff]
    %v938 = vld [vmem:[%s9 + $0x58] sm:$0xff]
    %v939 = vld [vmem:[%s9 + $0x60] sm:$0xff]
    %v940 = vld [vmem:[%s9 + $0x68] sm:$0xff]
    %v941 = vld [vmem:[%s9 + $0x70] sm:$0xff]
    %v942 = vld [vmem:[%s9 + $0x78] sm:$0xff]
    %v943 = vld [vmem:[#allocation4 + $0x2] sm:$0x3]
    %s944 = scalar_lea.vmem %s9, 128
    %v945 = vld [vmem:[%s944] sm:$0xff]
    %v946 = vld [vmem:[%s944 + $0x8] sm:$0xff]
    %v947 = vld [vmem:[%s944 + $0x10] sm:$0xff]
    %v948 = vld [vmem:[%s944 + $0x18] sm:$0xff]
    %v949 = vld [vmem:[%s944 + $0x20] sm:$0xff]
    %v950 = vld [vmem:[%s944 + $0x28] sm:$0xff]
    %v951 = vld [vmem:[%s944 + $0x30] sm:$0xff]
    %v952 = vld [vmem:[%s944 + $0x38] sm:$0xff]
    %v953 = vld [vmem:[%s944 + $0x40] sm:$0xff]
    %v954 = vld [vmem:[%s944 + $0x48] sm:$0xff]
    %v955 = vld [vmem:[%s944 + $0x50] sm:$0xff]
    %v956 = vld [vmem:[%s944 + $0x58] sm:$0xff]
    %v957 = vld [vmem:[%s944 + $0x60] sm:$0xff]
    %v958 = vld [vmem:[%s944 + $0x68] sm:$0xff]
    %v959 = vld [vmem:[%s944 + $0x70] sm:$0xff]
    %v960 = vld [vmem:[%s944 + $0x78] sm:$0xff]
    %961 = vmatprep.subr.mxu0 0.0
    %962 = vmatpush1.msra.mxu0 %v945
    %963 = vmatprep.subr.mxu0 0.0
    %964 = vmatpush1.msra.mxu0 %v946
    %965 = vmatprep.subr.mxu0 0.0
    %966 = vmatpush1.msra.mxu0 %v947
    %967 = vmatprep.subr.mxu0 0.0
    %968 = vmatpush1.msra.mxu0 %v948
    %969 = vmatprep.subr.mxu0 0.0
    %970 = vmatpush1.msra.mxu0 %v949
    %971 = vmatprep.subr.mxu0 0.0
    %972 = vmatpush1.msra.mxu0 %v950
    %973 = vmatprep.subr.mxu0 0.0
    %974 = vmatpush1.msra.mxu0 %v951
    %975 = vmatprep.subr.mxu0 0.0
    %976 = vmatpush1.msra.mxu0 %v952
    %977 = vmatprep.subr.mxu0 0.0
    %978 = vmatpush1.msra.mxu0 %v953
    %979 = vmatprep.subr.mxu0 0.0
    %980 = vmatpush1.msra.mxu0 %v954
    %981 = vmatprep.subr.mxu0 0.0
    %982 = vmatpush1.msra.mxu0 %v955
    %983 = vmatprep.subr.mxu0 0.0
    %984 = vmatpush1.msra.mxu0 %v956
    %985 = vmatprep.subr.mxu0 0.0
    %986 = vmatpush1.msra.mxu0 %v957
    %987 = vmatprep.subr.mxu0 0.0
    %988 = vmatpush1.msra.mxu0 %v958
    %989 = vmatprep.subr.mxu0 0.0
    %990 = vmatpush1.msra.mxu0 %v959
    %991 = vmatprep.subr.mxu0 0.0
    %992 = vmatpush1.msra.mxu0 %v960
    %993 = vmatprep.subr.mxu0 0.0
    %994 = vmatpush1.msra.mxu0 0.0
    %995 = vmatprep.subr.mxu0 0.0
    %996 = vmatpush1.msra.mxu0 0.0
    %997 = vmatprep.subr.mxu0 0.0
    %998 = vmatpush1.msra.mxu0 0.0
    %999 = vmatprep.subr.mxu0 0.0
    %1000 = vmatpush1.msra.mxu0 0.0
    %1001 = vmatprep.subr.mxu0 0.0
    %1002 = vmatpush1.msra.mxu0 0.0
    %1003 = vmatprep.subr.mxu0 0.0
    %1004 = vmatpush1.msra.mxu0 0.0
    %1005 = vmatprep.subr.mxu0 0.0
    %1006 = vmatpush1.msra.mxu0 0.0
    %1007 = vmatprep.subr.mxu0 0.0
    %1008 = vmatpush1.msra.mxu0 0.0
    %1009 = vmatprep.subr.mxu0 0.0
    %1010 = vmatpush1.msra.mxu0 0.0
    %1011 = vmatprep.subr.mxu0 0.0
    %1012 = vmatpush1.msra.mxu0 0.0
    %1013 = vmatprep.subr.mxu0 0.0
    %1014 = vmatpush1.msra.mxu0 0.0
    %1015 = vmatprep.subr.mxu0 0.0
    %1016 = vmatpush1.msra.mxu0 0.0
    %1017 = vmatprep.subr.mxu0 0.0
    %1018 = vmatpush1.msra.mxu0 0.0
    %1019 = vmatprep.subr.mxu0 0.0
    %1020 = vmatpush1.msra.mxu0 0.0
    %1021 = vmatprep.subr.mxu0 0.0
    %1022 = vmatpush1.msra.mxu0 0.0
    %1023 = vmatprep.subr.mxu0 0.0
    %1024 = vmatpush1.msra.mxu0 0.0
    %1025 = vmatprep.mubr.f32.mxu0 0.0
    %1026 = vmatmul.mubr.f32.gmra.mrb[0].mxu0 %v943
    %v1027 = vpop.f32.mrb[0].mxu0
    %v1028 = vadd.f32 0.0, %v1027
    %v1029 = vpop.f32.mrb[0].mxu0
    %1030 = vdwg.mxu0
    %1031 = vmatprep.subr.mxu0 0.0
    %1032 = vmatpush1.msra.mxu0 %v927
    %1033 = vmatprep.subr.mxu0 0.0
    %1034 = vmatpush1.msra.mxu0 %v928
    %1035 = vmatprep.subr.mxu0 0.0
    %1036 = vmatpush1.msra.mxu0 %v929
    %1037 = vmatprep.subr.mxu0 0.0
    %1038 = vmatpush1.msra.mxu0 %v930
    %1039 = vmatprep.subr.mxu0 0.0
    %1040 = vmatpush1.msra.mxu0 %v931
    %1041 = vmatprep.subr.mxu0 0.0
    %1042 = vmatpush1.msra.mxu0 %v932
    %1043 = vmatprep.subr.mxu0 0.0
    %1044 = vmatpush1.msra.mxu0 %v933
    %1045 = vmatprep.subr.mxu0 0.0
    %1046 = vmatpush1.msra.mxu0 %v934
    %1047 = vmatprep.subr.mxu0 0.0
    %1048 = vmatpush1.msra.mxu0 %v935
    %1049 = vmatprep.subr.mxu0 0.0
    %1050 = vmatpush1.msra.mxu0 %v936
    %1051 = vmatprep.subr.mxu0 0.0
    %1052 = vmatpush1.msra.mxu0 %v937
    %1053 = vmatprep.subr.mxu0 0.0
    %1054 = vmatpush1.msra.mxu0 %v938
    %1055 = vmatprep.subr.mxu0 0.0
    %1056 = vmatpush1.msra.mxu0 %v939
    %1057 = vmatprep.subr.mxu0 0.0
    %1058 = vmatpush1.msra.mxu0 %v940
    %1059 = vmatprep.subr.mxu0 0.0
    %1060 = vmatpush1.msra.mxu0 %v941
    %1061 = vmatprep.subr.mxu0 0.0
    %1062 = vmatpush1.msra.mxu0 %v942
    %1063 = vmatprep.subr.mxu0 0.0
    %1064 = vmatpush1.msra.mxu0 0.0
    %1065 = vmatprep.subr.mxu0 0.0
    %1066 = vmatpush1.msra.mxu0 0.0
    %1067 = vmatprep.subr.mxu0 0.0
    %1068 = vmatpush1.msra.mxu0 0.0
    %1069 = vmatprep.subr.mxu0 0.0
    %1070 = vmatpush1.msra.mxu0 0.0
    %1071 = vmatprep.subr.mxu0 0.0
    %1072 = vmatpush1.msra.mxu0 0.0
    %1073 = vmatprep.subr.mxu0 0.0
    %1074 = vmatpush1.msra.mxu0 0.0
    %1075 = vmatprep.subr.mxu0 0.0
    %1076 = vmatpush1.msra.mxu0 0.0
    %1077 = vmatprep.subr.mxu0 0.0
    %1078 = vmatpush1.msra.mxu0 0.0
    %1079 = vmatprep.subr.mxu0 0.0
    %1080 = vmatpush1.msra.mxu0 0.0
    %1081 = vmatprep.subr.mxu0 0.0
    %1082 = vmatpush1.msra.mxu0 0.0
    %1083 = vmatprep.subr.mxu0 0.0
    %1084 = vmatpush1.msra.mxu0 0.0
    %1085 = vmatprep.subr.mxu0 0.0
    %1086 = vmatpush1.msra.mxu0 0.0
    %1087 = vmatprep.subr.mxu0 0.0
    %1088 = vmatpush1.msra.mxu0 0.0
    %1089 = vmatprep.subr.mxu0 0.0
    %1090 = vmatpush1.msra.mxu0 0.0
    %1091 = vmatprep.subr.mxu0 0.0
    %1092 = vmatpush1.msra.mxu0 0.0
    %1093 = vmatprep.subr.mxu0 0.0
    %1094 = vmatpush1.msra.mxu0 0.0
    %1095 = vmatprep.mubr.f32.mxu0 0.0
    %1096 = vmatmul.mubr.f32.gmra.mrb[0].mxu0 %v926
    %v1097 = vpop.f32.mrb[0].mxu0
    %v1098 = vadd.f32 %v1028, %v1097
    %v1099 = vpop.f32.mrb[0].mxu0
    %1100 = vdwg.mxu0
    %v1101 = vld [vmem:[#allocation4 + $0x4] sm:$0x3]
    %s1102 = scalar_lea.vmem %s9, 256
    %v1103 = vld [vmem:[%s1102] sm:$0xff]
    %v1104 = vld [vmem:[%s1102 + $0x8] sm:$0xff]
    %v1105 = vld [vmem:[%s1102 + $0x10] sm:$0xff]
    %v1106 = vld [vmem:[%s1102 + $0x18] sm:$0xff]
    %v1107 = vld [vmem:[%s1102 + $0x20] sm:$0xff]
    %v1108 = vld [vmem:[%s1102 + $0x28] sm:$0xff]
    %v1109 = vld [vmem:[%s1102 + $0x30] sm:$0xff]
    %v1110 = vld [vmem:[%s1102 + $0x38] sm:$0xff]
    %v1111 = vld [vmem:[%s1102 + $0x40] sm:$0xff]
    %v1112 = vld [vmem:[%s1102 + $0x48] sm:$0xff]
    %v1113 = vld [vmem:[%s1102 + $0x50] sm:$0xff]
    %v1114 = vld [vmem:[%s1102 + $0x58] sm:$0xff]
    %v1115 = vld [vmem:[%s1102 + $0x60] sm:$0xff]
    %v1116 = vld [vmem:[%s1102 + $0x68] sm:$0xff]
    %v1117 = vld [vmem:[%s1102 + $0x70] sm:$0xff]
    %v1118 = vld [vmem:[%s1102 + $0x78] sm:$0xff]
    %1119 = vmatprep.subr.mxu0 0.0
    %1120 = vmatpush1.msra.mxu0 %v1103
    %1121 = vmatprep.subr.mxu0 0.0
    %1122 = vmatpush1.msra.mxu0 %v1104
    %1123 = vmatprep.subr.mxu0 0.0
    %1124 = vmatpush1.msra.mxu0 %v1105
    %1125 = vmatprep.subr.mxu0 0.0
    %1126 = vmatpush1.msra.mxu0 %v1106
    %1127 = vmatprep.subr.mxu0 0.0
    %1128 = vmatpush1.msra.mxu0 %v1107
    %1129 = vmatprep.subr.mxu0 0.0
    %1130 = vmatpush1.msra.mxu0 %v1108
    %1131 = vmatprep.subr.mxu0 0.0
    %1132 = vmatpush1.msra.mxu0 %v1109
    %1133 = vmatprep.subr.mxu0 0.0
    %1134 = vmatpush1.msra.mxu0 %v1110
    %1135 = vmatprep.subr.mxu0 0.0
    %1136 = vmatpush1.msra.mxu0 %v1111
    %1137 = vmatprep.subr.mxu0 0.0
    %1138 = vmatpush1.msra.mxu0 %v1112
    %1139 = vmatprep.subr.mxu0 0.0
    %1140 = vmatpush1.msra.mxu0 %v1113
    %1141 = vmatprep.subr.mxu0 0.0
    %1142 = vmatpush1.msra.mxu0 %v1114
    %1143 = vmatprep.subr.mxu0 0.0
    %1144 = vmatpush1.msra.mxu0 %v1115
    %1145 = vmatprep.subr.mxu0 0.0
    %1146 = vmatpush1.msra.mxu0 %v1116
    %1147 = vmatprep.subr.mxu0 0.0
    %1148 = vmatpush1.msra.mxu0 %v1117
    %1149 = vmatprep.subr.mxu0 0.0
    %1150 = vmatpush1.msra.mxu0 %v1118
    %1151 = vmatprep.subr.mxu0 0.0
    %1152 = vmatpush1.msra.mxu0 0.0
    %1153 = vmatprep.subr.mxu0 0.0
    %1154 = vmatpush1.msra.mxu0 0.0
    %1155 = vmatprep.subr.mxu0 0.0
    %1156 = vmatpush1.msra.mxu0 0.0
    %1157 = vmatprep.subr.mxu0 0.0
    %1158 = vmatpush1.msra.mxu0 0.0
    %1159 = vmatprep.subr.mxu0 0.0
    %1160 = vmatpush1.msra.mxu0 0.0
    %1161 = vmatprep.subr.mxu0 0.0
    %1162 = vmatpush1.msra.mxu0 0.0
    %1163 = vmatprep.subr.mxu0 0.0
    %1164 = vmatpush1.msra.mxu0 0.0
    %1165 = vmatprep.subr.mxu0 0.0
    %1166 = vmatpush1.msra.mxu0 0.0
    %1167 = vmatprep.subr.mxu0 0.0
    %1168 = vmatpush1.msra.mxu0 0.0
    %1169 = vmatprep.subr.mxu0 0.0
    %1170 = vmatpush1.msra.mxu0 0.0
    %1171 = vmatprep.subr.mxu0 0.0
    %1172 = vmatpush1.msra.mxu0 0.0
    %1173 = vmatprep.subr.mxu0 0.0
    %1174 = vmatpush1.msra.mxu0 0.0
    %1175 = vmatprep.subr.mxu0 0.0
    %1176 = vmatpush1.msra.mxu0 0.0
    %1177 = vmatprep.subr.mxu0 0.0
    %1178 = vmatpush1.msra.mxu0 0.0
    %1179 = vmatprep.subr.mxu0 0.0
    %1180 = vmatpush1.msra.mxu0 0.0
    %1181 = vmatprep.subr.mxu0 0.0
    %1182 = vmatpush1.msra.mxu0 0.0
    %1183 = vmatprep.mubr.f32.mxu0 0.0
    %1184 = vmatmul.mubr.f32.gmra.mrb[0].mxu0 %v1101
    %v1185 = vpop.f32.mrb[0].mxu0
    %v1186 = vadd.f32 0.0, %v1185
    %v1187 = vpop.f32.mrb[0].mxu0
    %1188 = vdwg.mxu0
    %v1189 = vadd.f32 %v1098, %v1186
    %v1190 = vld [vmem:[%s10] sm:$0x1]
    %v1192 = vlaneseq
    %v1193 = vshrl.u32 %v1192, 7
    %v1194 = vsub.s32 0, %v1193
    %v1195 = vrot.slane %v1190, %v1194
    %v1197 = vadd.f32 %v1189, %v1195
    %v1198 = vmax.f32 %v1197, 0.0
    %v1199 = vld [vmem:[%s11] sm:$0xff]
    %v1200 = vld [vmem:[%s11 + $0x8] sm:$0xff]
    %v1201 = vld [vmem:[%s11 + $0x10] sm:$0xff]
    %v1202 = vld [vmem:[%s11 + $0x18] sm:$0xff]
    %v1203 = vld [vmem:[%s12] sm:$0x1]
    %v1205 = vlaneseq
    %v1206 = vshrl.u32 %v1205, 7
    %v1207 = vsub.s32 0, %v1206
    %v1208 = vrot.slane %v1203, %v1207
    %v1211 = vsel %vm235, %v1198, 0
    %1213 = vmatprep.subr.mxu0 0.0
    %1214 = vmatpush1.msra.mxu0 %v1199
    %1215 = vmatprep.subr.mxu0 0.0
    %1216 = vmatpush1.msra.mxu0 %v1200
    %1217 = vmatprep.subr.mxu0 0.0
    %1218 = vmatpush1.msra.mxu0 %v1201
    %1219 = vmatprep.subr.mxu0 0.0
    %1220 = vmatpush1.msra.mxu0 %v1202
    %1221 = vmatprep.subr.mxu0 0.0
    %1222 = vmatpush1.msra.mxu0 0.0
    %1223 = vmatprep.subr.mxu0 0.0
    %1224 = vmatpush1.msra.mxu0 0.0
    %1225 = vmatprep.subr.mxu0 0.0
    %1226 = vmatpush1.msra.mxu0 0.0
    %1227 = vmatprep.subr.mxu0 0.0
    %1228 = vmatpush1.msra.mxu0 0.0
    %1229 = vmatprep.subr.mxu0 0.0
    %1230 = vmatpush1.msra.mxu0 0.0
    %1231 = vmatprep.subr.mxu0 0.0
    %1232 = vmatpush1.msra.mxu0 0.0
    %1233 = vmatprep.subr.mxu0 0.0
    %1234 = vmatpush1.msra.mxu0 0.0
    %1235 = vmatprep.subr.mxu0 0.0
    %1236 = vmatpush1.msra.mxu0 0.0
    %1237 = vmatprep.subr.mxu0 0.0
    %1238 = vmatpush1.msra.mxu0 0.0
    %1239 = vmatprep.subr.mxu0 0.0
    %1240 = vmatpush1.msra.mxu0 0.0
    %1241 = vmatprep.subr.mxu0 0.0
    %1242 = vmatpush1.msra.mxu0 0.0
    %1243 = vmatprep.subr.mxu0 0.0
    %1244 = vmatpush1.msra.mxu0 0.0
    %1245 = vmatprep.subr.mxu0 0.0
    %1246 = vmatpush1.msra.mxu0 0.0
    %1247 = vmatprep.subr.mxu0 0.0
    %1248 = vmatpush1.msra.mxu0 0.0
    %1249 = vmatprep.subr.mxu0 0.0
    %1250 = vmatpush1.msra.mxu0 0.0
    %1251 = vmatprep.subr.mxu0 0.0
    %1252 = vmatpush1.msra.mxu0 0.0
    %1253 = vmatprep.subr.mxu0 0.0
    %1254 = vmatpush1.msra.mxu0 0.0
    %1255 = vmatprep.subr.mxu0 0.0
    %1256 = vmatpush1.msra.mxu0 0.0
    %1257 = vmatprep.subr.mxu0 0.0
    %1258 = vmatpush1.msra.mxu0 0.0
    %1259 = vmatprep.subr.mxu0 0.0
    %1260 = vmatpush1.msra.mxu0 0.0
    %1261 = vmatprep.subr.mxu0 0.0
    %1262 = vmatpush1.msra.mxu0 0.0
    %1263 = vmatprep.subr.mxu0 0.0
    %1264 = vmatpush1.msra.mxu0 0.0
    %1265 = vmatprep.subr.mxu0 0.0
    %1266 = vmatpush1.msra.mxu0 0.0
    %1267 = vmatprep.subr.mxu0 0.0
    %1268 = vmatpush1.msra.mxu0 0.0
    %1269 = vmatprep.subr.mxu0 0.0
    %1270 = vmatpush1.msra.mxu0 0.0
    %1271 = vmatprep.subr.mxu0 0.0
    %1272 = vmatpush1.msra.mxu0 0.0
    %1273 = vmatprep.subr.mxu0 0.0
    %1274 = vmatpush1.msra.mxu0 0.0
    %1275 = vmatprep.subr.mxu0 0.0
    %1276 = vmatpush1.msra.mxu0 0.0
    %1277 = vmatprep.mubr.f32.mxu0 0.0
    %1278 = vmatmul.mubr.f32.gmra.mrb[0].mxu0 %v1211
    %v1279 = vpop.f32.mrb[0].mxu0
    %v1280 = vadd.f32 %v1208, %v1279
    %v1281 = vpop.f32.mrb[0].mxu0
    %1282 = vdwg.mxu0
    %v1283 = vmax.f32 %v1280, 0.0
    %v1284 = vld [vmem:[%s13] sm:$0xff]
    %v1285 = vld [vmem:[%s13 + $0x8] sm:$0xff]
    %v1286 = vld [vmem:[%s14] sm:$0x1]
    %v1288 = vlaneseq
    %v1289 = vshrl.u32 %v1288, 7
    %v1290 = vsub.s32 0, %v1289
    %v1291 = vrot.slane %v1286, %v1290
    %v1294 = vsel %vm776, %v1283, 0
    %1296 = vmatprep.subr.mxu0 0.0
    %1297 = vmatpush1.msra.mxu0 %v1284
    %1298 = vmatprep.subr.mxu0 0.0
    %1299 = vmatpush1.msra.mxu0 %v1285
    %1300 = vmatprep.subr.mxu0 0.0
    %1301 = vmatpush1.msra.mxu0 0.0
    %1302 = vmatprep.subr.mxu0 0.0
    %1303 = vmatpush1.msra.mxu0 0.0
    %1304 = vmatprep.subr.mxu0 0.0
    %1305 = vmatpush1.msra.mxu0 0.0
    %1306 = vmatprep.subr.mxu0 0.0
    %1307 = vmatpush1.msra.mxu0 0.0
    %1308 = vmatprep.subr.mxu0 0.0
    %1309 = vmatpush1.msra.mxu0 0.0
    %1310 = vmatprep.subr.mxu0 0.0
    %1311 = vmatpush1.msra.mxu0 0.0
    %1312 = vmatprep.subr.mxu0 0.0
    %1313 = vmatpush1.msra.mxu0 0.0
    %1314 = vmatprep.subr.mxu0 0.0
    %1315 = vmatpush1.msra.mxu0 0.0
    %1316 = vmatprep.subr.mxu0 0.0
    %1317 = vmatpush1.msra.mxu0 0.0
    %1318 = vmatprep.subr.mxu0 0.0
    %1319 = vmatpush1.msra.mxu0 0.0
    %1320 = vmatprep.subr.mxu0 0.0
    %1321 = vmatpush1.msra.mxu0 0.0
    %1322 = vmatprep.subr.mxu0 0.0
    %1323 = vmatpush1.msra.mxu0 0.0
    %1324 = vmatprep.subr.mxu0 0.0
    %1325 = vmatpush1.msra.mxu0 0.0
    %1326 = vmatprep.subr.mxu0 0.0
    %1327 = vmatpush1.msra.mxu0 0.0
    %1328 = vmatprep.subr.mxu0 0.0
    %1329 = vmatpush1.msra.mxu0 0.0
    %1330 = vmatprep.subr.mxu0 0.0
    %1331 = vmatpush1.msra.mxu0 0.0
    %1332 = vmatprep.subr.mxu0 0.0
    %1333 = vmatpush1.msra.mxu0 0.0
    %1334 = vmatprep.subr.mxu0 0.0
    %1335 = vmatpush1.msra.mxu0 0.0
    %1336 = vmatprep.subr.mxu0 0.0
    %1337 = vmatpush1.msra.mxu0 0.0
    %1338 = vmatprep.subr.mxu0 0.0
    %1339 = vmatpush1.msra.mxu0 0.0
    %1340 = vmatprep.subr.mxu0 0.0
    %1341 = vmatpush1.msra.mxu0 0.0
    %1342 = vmatprep.subr.mxu0 0.0
    %1343 = vmatpush1.msra.mxu0 0.0
    %1344 = vmatprep.subr.mxu0 0.0
    %1345 = vmatpush1.msra.mxu0 0.0
    %1346 = vmatprep.subr.mxu0 0.0
    %1347 = vmatpush1.msra.mxu0 0.0
    %1348 = vmatprep.subr.mxu0 0.0
    %1349 = vmatpush1.msra.mxu0 0.0
    %1350 = vmatprep.subr.mxu0 0.0
    %1351 = vmatpush1.msra.mxu0 0.0
    %1352 = vmatprep.subr.mxu0 0.0
    %1353 = vmatpush1.msra.mxu0 0.0
    %1354 = vmatprep.subr.mxu0 0.0
    %1355 = vmatpush1.msra.mxu0 0.0
    %1356 = vmatprep.subr.mxu0 0.0
    %1357 = vmatpush1.msra.mxu0 0.0
    %1358 = vmatprep.subr.mxu0 0.0
    %1359 = vmatpush1.msra.mxu0 0.0
    %1360 = vmatprep.mubr.f32.mxu0 0.0
    %1361 = vmatmul.mubr.f32.gmra.mrb[0].mxu0 %v1294
    %v1362 = vpop.f32.mrb[0].mxu0
    %v1363 = vadd.f32 %v1291, %v1362
    %v1364 = vpop.f32.mrb[0].mxu0
    %1365 = vdwg.mxu0
    %1366 = vst [vmem:[#allocation5] sm:$0x3] %v1363
    // Predicated region
    $region62: #{cnn_forward.1} parent=1 // pred_check
      _
    $region63: #{cnn_forward.1} parent=1 // pred_check_branch
      %1368 = sbr.rel (0) target = $region65
    $region64: #{cnn_forward.1} parent=1 // pred_region
      %s1370 = ssub.s32 32, 32
      %1371 = vsyncadd [#allocation6], %s1370
      %s1373 = sshll.u32 [#allocation5], 4
      %s1374 = int_to_ptr.vmem [resolvable:$true] %s1373
      %1376 = dma.vmem_to_hbm [thread:$0]  %s1374, 32, %s15, [#allocation6]
    $region65: #{cnn_forward.1} parent=1 // pred_fallthru
      _
    // Predicated region
    $region66: #{cnn_forward.1} parent=1 // pred_check
      _
    $region67: #{cnn_forward.1} parent=1 // pred_check_branch
      %1378 = sbr.rel (0) target = $region69
    $region68: #{cnn_forward.1} parent=1 // pred_region
      %1379 = dma.done [#allocation6], 32
    $region69: #{cnn_forward.1} parent=1 // pred_fallthru
      _
    %1380 = vsyncpa [#allocation6], 1

</llo_original>
